<compile_context>
chip_gen: v5e
topology: v5e:2x2
jax: 0.10.0
libtpu: 0.0.40
codegen_flags: <defaults>
</compile_context>

<pallas_src>
import functools

import jax
import jax.numpy as jnp
import numpy as np
from jax.experimental import pallas as pl
from jax.experimental.pallas import tpu as pltpu


# ----------------------------------- kernel -----------------------------------

def _basic_block_kernel(*refs, H, WP, WE, scaler, has_sc_conv):
    """One whole image per grid step.  All activations are lane-dense 2-D
    (rows, W*C) slabs:
      x_ref   : (H+4, W*Cin) bf16   image incl. 2-row zero halo top/bottom
      a*_ref  : dy-folded banded / block-diagonal bf16 weight matrices
      stA_ref : (2, WE) f32  folded-BN scale/shift for branch1's first BN
      stB_ref : (8, WP) f32  folded-BN scale/shift for all W*planes-wide BNs
      out_ref : (H, WP)  (bf16 by default)
    """
    if has_sc_conv:
        (x_ref, a1_ref, a1b_ref, a2_ref, a3_ref, asc_ref,
         stA_ref, stB_ref, out_ref) = refs
    else:
        (x_ref, a1_ref, a1b_ref, a2_ref, a3_ref,
         stA_ref, stB_ref, out_ref) = refs

    HM = H + 2  # mid rows: image + 1 zero-pad row each side (conv3's padding)

    def conv3x3(src, a_ref, rows, wco):
        # src: (rows+2, K) bf16.  ONE MXU push at N = 3*wco (dx taps and the W
        # zero-padding are folded into the banded weight); the 3 kernel-row
        # (dy) taps are summed with 128-aligned shifted lane-block adds.
        p = jnp.dot(src, a_ref[...], preferred_element_type=jnp.float32)
        return (p[0:rows, 0:wco]
                + p[1:rows + 1, wco:2 * wco]
                + p[2:rows + 2, 2 * wco:3 * wco])

    def bn(y, st_ref, r, relu):
        # rows r / r+1 of the stacked scale/shift table, lane-dense f32 math.
        y = y * st_ref[r:r + 1, :] + st_ref[r + 1:r + 2, :]
        return jnp.maximum(y, 0.0) if relu else y

    x = x_ref[...]                                        # (H+4, W*Cin) bf16

    # ---- branch1: conv3x3 -> BN -> ReLU -> conv1x1 -> BN -> ReLU
    b1 = bn(conv3x3(x, a1_ref, HM, WE), stA_ref, 0, relu=True)
    b1 = jnp.dot(b1.astype(jnp.bfloat16), a1b_ref[...],
                 preferred_element_type=jnp.float32)
    b1 = bn(b1, stB_ref, 0, relu=True)

    # ---- branch2: conv3x3 -> BN -> ReLU
    b2 = bn(conv3x3(x, a2_ref, HM, WP), stB_ref, 2, relu=True)

    # ---- combine; the two out-of-image mid rows are conv3's zero padding
    mid = scaler * b1 + b2                                # (H+2, WP) f32
    row = jax.lax.broadcasted_iota(jnp.int32, (HM, 1), 0)
    mid = jnp.where((row >= 1) & (row <= H), mid, 0.0).astype(jnp.bfloat16)

    # ---- conv3 -> BN (no ReLU)
    out = bn(conv3x3(mid, a3_ref, H, WP), stB_ref, 4, relu=False)

    # ---- shortcut
    x_in = x[2:2 + H, :]                                  # image interior
    if has_sc_conv:
        sc = jnp.dot(x_in, asc_ref[...], preferred_element_type=jnp.float32)
        sc = bn(sc, stB_ref, 6, relu=False)
    else:
        sc = x_in.astype(jnp.float32)                     # identity shortcut

    out_ref[...] = (out + sc).astype(out_ref.dtype)


# ---------------------------------- wrapper ------------------------------------

def basic_block_pallas(x_nhwc, kparams, *, scaler, has_sc_conv,
                       out_dtype=jnp.bfloat16):
    """x_nhwc: (N, H, W, Cin).  Returns (N, H, W, planes) in `out_dtype`."""
    N, H, W, Cin = x_nhwc.shape
    WE = kparams["stA"].shape[1]          # W * expansion*planes
    WP = kparams["stB"].shape[1]          # W * planes
    planes = WP // W

    # Lane-dense bf16 slab per image + 2-row zero halo (spatial padding of the
    # two stacked 3x3 convs).  One whole image per grid step -> no banding, no
    # duplicated-halo re-materialization; just a single pad + reshape.
    x = x_nhwc.astype(jnp.bfloat16).reshape(N, H, W * Cin)
    xp = jnp.pad(x, ((0, 0), (2, 2), (0, 0)))             # (N, H+4, W*Cin)

    names = ["a1", "a1b", "a2", "a3"]
    if has_sc_conv:
        names.append("asc")               # only DMA'd when the block has one
    names += ["stA", "stB"]
    weights = [kparams[n] for n in names]

    def whole(a):                         # grid-invariant resident weights
        zeros = (0,) * a.ndim
        # TODO(synk): for large W*C on v7x add pipeline_mode=pl.Buffered(1)
        # here to single-buffer these (halves resident weight VMEM).
        return pl.BlockSpec(a.shape, lambda i, _z=zeros: _z)

    # Explicit VMEM budget from the actual shapes (+25% headroom) so oversized
    # configurations fail loudly at compile time.
    blk_in = (H + 4) * W * Cin * 2                         # bf16 input block
    blk_out = H * WP * np.dtype(out_dtype).itemsize
    w_bytes = sum(int(a.size) * a.dtype.itemsize for a in weights)
    interm = (H + 4) * (3 * W * Cin + 6 * WE + 12 * WP) * 4
    vmem_limit = int(1.25 * (2 * (blk_in + blk_out) + 2 * w_bytes + interm))
    vmem_limit = min(max(vmem_limit, 4 << 20), 64 << 20)

    kernel = functools.partial(_basic_block_kernel, H=H, WP=WP, WE=WE,
                               scaler=scaler, has_sc_conv=has_sc_conv)
    out = pl.pallas_call(
        kernel,
        grid=(N,),                        # one image per step; grid >= 2 keeps
                                          # both v7x TensorCores busy
        in_specs=[pl.BlockSpec((None, H + 4, W * Cin), lambda i: (i, 0, 0))]
                 + [whole(a) for a in weights],
        out_specs=pl.BlockSpec((None, H, WP), lambda i: (i, 0, 0)),
        out_shape=jax.ShapeDtypeStruct((N, H, WP), out_dtype),
        compiler_params=pltpu.CompilerParams(
            dimension_semantics=("parallel",),
            vmem_limit_bytes=vmem_limit),
    )(xp, *weights)
    return out.reshape(N, H, W, planes)


# -------------------- parameter construction / host-side packing ---------------

def _q_bf16(x):
    # Round-trip through bf16 so the kernel (bf16 MXU operands) and the f32
    # reference see identical leaf values; only intermediate rounding differs.
    return x.astype(jnp.bfloat16).astype(jnp.float32)


def _fold_bn(key, c, eps=1e-5):
    k1, k2, k3, k4 = jax.random.split(key, 4)
    gamma = 1.0 + 0.1 * jax.random.normal(k1, (c,), jnp.float32)
    beta = 0.1 * jax.random.normal(k2, (c,), jnp.float32)
    mean = 0.1 * jax.random.normal(k3, (c,), jnp.float32)
    var = 1.0 + 0.1 * jax.random.uniform(k4, (c,), jnp.float32)
    s = gamma / jnp.sqrt(var + eps)
    t = beta - s * mean
    return s.reshape(1, c), t.reshape(1, c)


def make_params(key, in_planes, planes, expansion):
    ep = expansion * planes
    ks = jax.random.split(key, 10)
    p = {}
    p["w1a"] = _q_bf16(0.2 * jax.random.normal(ks[0], (3, 3, in_planes, ep), jnp.float32))
    p["s1a"], p["t1a"] = _fold_bn(ks[1], ep)
    p["w1b"] = _q_bf16(0.2 * jax.random.normal(ks[2], (ep, planes), jnp.float32))
    p["s1b"], p["t1b"] = _fold_bn(ks[3], planes)
    p["w2"] = _q_bf16(0.2 * jax.random.normal(ks[4], (3, 3, in_planes, planes), jnp.float32))
    p["s2"], p["t2"] = _fold_bn(ks[5], planes)
    p["w3"] = _q_bf16(0.2 * jax.random.normal(ks[6], (3, 3, planes, planes), jnp.float32))
    p["s3"], p["t3"] = _fold_bn(ks[7], planes)
    p["wsc"] = _q_bf16(0.2 * jax.random.normal(ks[8], (in_planes, planes), jnp.float32))
    p["ssc"], p["tsc"] = _fold_bn(ks[9], planes)
    return p


def pack_params(params, W):
    """Host-side weight repacking (done once):
       * 3x3 conv (3,3,Ci,Co) -> dy-folded banded bf16 matrix (W*Ci, 3*W*Co)
         (dx taps + W zero-padding folded in; dy folded along the N dim so the
         kernel issues ONE matmul per 3x3 conv).
       * 1x1 conv (Ci,Co)     -> block-diagonal bf16 matrix (W*Ci, W*Co).
       * BN scale/shift       -> lane-dense f32 rows, stacked into two tables.
       NOTE: this W-folded layout is intended for small C / W (CIFAR-style
       reducenet); see TODO at top for larger shapes.
    """
    def banded_fused(w):
        w = np.asarray(jax.device_get(w), np.float32)        # (3,3,ci,co)
        ci, co = w.shape[2], w.shape[3]
        a = np.zeros((3, W * ci, W * co), np.float32)
        for dy in range(3):
            for dx in range(3):
                for xc in range(W):
                    xi = xc + dx - 1
                    if 0 <= xi < W:
                        a[dy, xi * ci:(xi + 1) * ci, xc * co:(xc + 1) * co] = w[dy, dx]
        return jnp.asarray(np.concatenate([a[0], a[1], a[2]], axis=1),
                           jnp.bfloat16)                      # (W*ci, 3*W*co)

    def blockdiag(w):
        w = np.asarray(jax.device_get(w), np.float32)
        ci, co = w.shape
        a = np.zeros((W * ci, W * co), np.float32)
        for xc in range(W):
            a[xc * ci:(xc + 1) * ci, xc * co:(xc + 1) * co] = w
        return jnp.asarray(a, jnp.bfloat16)

    def lane_tile(v):
        return np.tile(np.asarray(jax.device_get(v), np.float32), (1, W))

    stA = jnp.asarray(np.concatenate([lane_tile(params["s1a"]),
                                      lane_tile(params["t1a"])], axis=0),
                      jnp.float32)
    stB = jnp.asarray(np.concatenate(
        [lane_tile(params[n]) for n in
         ("s1b", "t1b", "s2", "t2", "s3", "t3", "ssc", "tsc")], axis=0),
        jnp.float32)

    return {
        "a1": banded_fused(params["w1a"]),
        "a1b": blockdiag(params["w1b"]),
        "a2": banded_fused(params["w2"]),
        "a3": banded_fused(params["w3"]),
        "asc": blockdiag(params["wsc"]),
        "stA": stA,
        "stB": stB,
    }


# -------------------- pure-JAX reference (for sanity check) --------------------

def _conv(x, w, pad):
    return jax.lax.conv_general_dilated(
        x, w, (1, 1), ((pad, pad), (pad, pad)),
        dimension_numbers=("NHWC", "HWIO", "NHWC"))


def ref_forward(x, p, scaler, has_sc_conv):
    relu = lambda v: jnp.maximum(v, 0.0)
    b1 = relu(_conv(x, p["w1a"], 1) * p["s1a"] + p["t1a"])
    b1 = relu(_conv(b1, p["w1b"][None, None], 0) * p["s1b"] + p["t1b"])
    b2 = relu(_conv(x, p["w2"], 1) * p["s2"] + p["t2"])
    out = scaler * b1 + b2
    out = _conv(out, p["w3"], 1) * p["s3"] + p["t3"]
    if has_sc_conv:
        sc = _conv(x, p["wsc"][None, None], 0) * p["ssc"] + p["tsc"]
    else:
        sc = x
    return out + sc


if __name__ == "__main__":
    # NCHW (2, 4, 16, 16) input, in_planes=4, planes=8, expansion=2, stride=1.
    N, Cin, H, W = 2, 4, 16, 16
    planes, expansion, stride, scaler = 8, 2, 1, 0.5
    has_sc_conv = (stride != 1) or (Cin != planes)

    key = jax.random.PRNGKey(0)
    kx, kp = jax.random.split(key)
    x_nchw = jax.random.normal(kx, (N, Cin, H, W), jnp.float32)
    x_nhwc = _q_bf16(jnp.transpose(x_nchw, (0, 2, 3, 1)))   # kernel layout: NHWC

    params = make_params(kp, Cin, planes, expansion)
    kparams = pack_params(params, W)

    out = basic_block_pallas(x_nhwc, kparams, scaler=scaler,
                             has_sc_conv=has_sc_conv)
    out = jax.block_until_ready(out)

    ref = jax.block_until_ready(ref_forward(x_nhwc, params, scaler, has_sc_conv))
    # bf16 MXU operands + two intermediate bf16 casts (b1, mid) + bf16 output
    # vs. an all-f32 reference: deviation is ~|out| * 2^-9, far below tolerance.
    np.testing.assert_allclose(np.asarray(out.astype(jnp.float32)),
                               np.asarray(ref), rtol=2e-2, atol=2e-2)
    print("KERNEL_OK")
</pallas_src>

<mosaic_0001>
module attributes {stable_mosaic.version = 11 : i64} {
  func.func @_basic_block_kernel(%arg0: i32, %arg1: memref<1x20x64xbf16, #tpu.memory_space<vmem>>, %arg2: memref<64x768xbf16, #tpu.memory_space<vmem>>, %arg3: memref<256x128xbf16, #tpu.memory_space<vmem>>, %arg4: memref<64x384xbf16, #tpu.memory_space<vmem>>, %arg5: memref<128x384xbf16, #tpu.memory_space<vmem>>, %arg6: memref<64x128xbf16, #tpu.memory_space<vmem>>, %arg7: memref<2x256xf32, #tpu.memory_space<vmem>>, %arg8: memref<8x128xf32, #tpu.memory_space<vmem>>, %arg9: memref<1x16x128xbf16, #tpu.memory_space<vmem>>) attributes {dimension_semantics = [#tpu.dimension_semantics<parallel>], iteration_bounds = array<i64: 2>, scalar_prefetch = 0 : i64, scratch_operands = 0 : i64, tpu.core_type = #tpu.core_type<tc>, window_params = [{transform_indices = @transform_0, window_bounds = array<i64: 1, 20, 64>}, {pipeline_mode = #tpu.pipeline_mode<synchronous>, transform_indices = @transform_1, window_bounds = array<i64: 64, 768>}, {pipeline_mode = #tpu.pipeline_mode<synchronous>, transform_indices = @transform_2, window_bounds = array<i64: 256, 128>}, {pipeline_mode = #tpu.pipeline_mode<synchronous>, transform_indices = @transform_3, window_bounds = array<i64: 64, 384>}, {pipeline_mode = #tpu.pipeline_mode<synchronous>, transform_indices = @transform_4, window_bounds = array<i64: 128, 384>}, {pipeline_mode = #tpu.pipeline_mode<synchronous>, transform_indices = @transform_5, window_bounds = array<i64: 64, 128>}, {pipeline_mode = #tpu.pipeline_mode<synchronous>, transform_indices = @transform_6, window_bounds = array<i64: 2, 256>}, {pipeline_mode = #tpu.pipeline_mode<synchronous>, transform_indices = @transform_7, window_bounds = array<i64: 8, 128>}, {transform_indices = @transform_8, window_bounds = array<i64: 1, 16, 128>}]} {
    %c0 = arith.constant 0 : index
    %c0_0 = arith.constant 0 : index
    %c0_1 = arith.constant 0 : index
    %0 = vector.load %arg1[%c0, %c0_0, %c0_1] : memref<1x20x64xbf16, #tpu.memory_space<vmem>>, vector<1x20x64xbf16>
    %1 = vector.shape_cast %0 : vector<1x20x64xbf16> to vector<20x64xbf16>
    %c0_2 = arith.constant 0 : index
    %c0_3 = arith.constant 0 : index
    %2 = vector.load %arg2[%c0_2, %c0_3] : memref<64x768xbf16, #tpu.memory_space<vmem>>, vector<64x768xbf16>
    %cst = arith.constant dense<0.000000e+00> : vector<20x768xf32>
    %3 = tpu.matmul %1, %2, %cst {dimension_numbers = #tpu.dot_dimension_numbers<[1], [0], [0], [1], [0, 0, 1, 1], [], []>} : vector<20x64xbf16>, vector<64x768xbf16>, vector<20x768xf32> -> vector<20x768xf32>
    %4 = vector.extract_strided_slice %3 {offsets = [0, 0], sizes = [18, 256], strides = [1, 1]} : vector<20x768xf32> to vector<18x256xf32>
    %5 = vector.extract_strided_slice %3 {offsets = [1, 256], sizes = [18, 256], strides = [1, 1]} : vector<20x768xf32> to vector<18x256xf32>
    %6 = arith.addf %4, %5 : vector<18x256xf32>
    %7 = vector.extract_strided_slice %3 {offsets = [2, 512], sizes = [18, 256], strides = [1, 1]} : vector<20x768xf32> to vector<18x256xf32>
    %8 = arith.addf %6, %7 : vector<18x256xf32>
    %c0_4 = arith.constant 0 : index
    %c0_5 = arith.constant 0 : index
    %9 = vector.load %arg7[%c0_4, %c0_5] : memref<2x256xf32, #tpu.memory_space<vmem>>, vector<1x256xf32>
    %10 = vector.broadcast %9 : vector<1x256xf32> to vector<18x256xf32>
    %11 = arith.mulf %8, %10 : vector<18x256xf32>
    %c1 = arith.constant 1 : index
    %c0_6 = arith.constant 0 : index
    %12 = vector.load %arg7[%c1, %c0_6] : memref<2x256xf32, #tpu.memory_space<vmem>>, vector<1x256xf32>
    %13 = vector.broadcast %12 : vector<1x256xf32> to vector<18x256xf32>
    %14 = arith.addf %11, %13 : vector<18x256xf32>
    %cst_7 = arith.constant 0.000000e+00 : f32
    %15 = vector.broadcast %cst_7 : f32 to vector<18x256xf32>
    %16 = arith.maximumf %14, %15 : vector<18x256xf32>
    %17 = arith.truncf %16 : vector<18x256xf32> to vector<18x256xbf16>
    %c0_8 = arith.constant 0 : index
    %c0_9 = arith.constant 0 : index
    %18 = vector.load %arg3[%c0_8, %c0_9] : memref<256x128xbf16, #tpu.memory_space<vmem>>, vector<256x128xbf16>
    %cst_10 = arith.constant dense<0.000000e+00> : vector<18x128xf32>
    %19 = tpu.matmul %17, %18, %cst_10 {dimension_numbers = #tpu.dot_dimension_numbers<[1], [0], [0], [1], [0, 0, 1, 1], [], []>} : vector<18x256xbf16>, vector<256x128xbf16>, vector<18x128xf32> -> vector<18x128xf32>
    %c0_11 = arith.constant 0 : index
    %c0_12 = arith.constant 0 : index
    %20 = vector.load %arg8[%c0_11, %c0_12] : memref<8x128xf32, #tpu.memory_space<vmem>>, vector<1x128xf32>
    %21 = vector.broadcast %20 : vector<1x128xf32> to vector<18x128xf32>
    %22 = arith.mulf %19, %21 : vector<18x128xf32>
    %c1_13 = arith.constant 1 : index
    %c0_14 = arith.constant 0 : index
    %23 = vector.load %arg8[%c1_13, %c0_14] : memref<8x128xf32, #tpu.memory_space<vmem>>, vector<1x128xf32>
    %24 = vector.broadcast %23 : vector<1x128xf32> to vector<18x128xf32>
    %25 = arith.addf %22, %24 : vector<18x128xf32>
    %cst_15 = arith.constant 0.000000e+00 : f32
    %26 = vector.broadcast %cst_15 : f32 to vector<18x128xf32>
    %27 = arith.maximumf %25, %26 : vector<18x128xf32>
    %c0_16 = arith.constant 0 : index
    %c0_17 = arith.constant 0 : index
    %28 = vector.load %arg4[%c0_16, %c0_17] : memref<64x384xbf16, #tpu.memory_space<vmem>>, vector<64x384xbf16>
    %cst_18 = arith.constant dense<0.000000e+00> : vector<20x384xf32>
    %29 = tpu.matmul %1, %28, %cst_18 {dimension_numbers = #tpu.dot_dimension_numbers<[1], [0], [0], [1], [0, 0, 1, 1], [], []>} : vector<20x64xbf16>, vector<64x384xbf16>, vector<20x384xf32> -> vector<20x384xf32>
    %30 = vector.extract_strided_slice %29 {offsets = [0, 0], sizes = [18, 128], strides = [1, 1]} : vector<20x384xf32> to vector<18x128xf32>
    %31 = vector.extract_strided_slice %29 {offsets = [1, 128], sizes = [18, 128], strides = [1, 1]} : vector<20x384xf32> to vector<18x128xf32>
    %32 = arith.addf %30, %31 : vector<18x128xf32>
    %33 = vector.extract_strided_slice %29 {offsets = [2, 256], sizes = [18, 128], strides = [1, 1]} : vector<20x384xf32> to vector<18x128xf32>
    %34 = arith.addf %32, %33 : vector<18x128xf32>
    %c2 = arith.constant 2 : index
    %c0_19 = arith.constant 0 : index
    %35 = vector.load %arg8[%c2, %c0_19] : memref<8x128xf32, #tpu.memory_space<vmem>>, vector<1x128xf32>
    %36 = vector.broadcast %35 : vector<1x128xf32> to vector<18x128xf32>
    %37 = arith.mulf %34, %36 : vector<18x128xf32>
    %c3 = arith.constant 3 : index
    %c0_20 = arith.constant 0 : index
    %38 = vector.load %arg8[%c3, %c0_20] : memref<8x128xf32, #tpu.memory_space<vmem>>, vector<1x128xf32>
    %39 = vector.broadcast %38 : vector<1x128xf32> to vector<18x128xf32>
    %40 = arith.addf %37, %39 : vector<18x128xf32>
    %cst_21 = arith.constant 0.000000e+00 : f32
    %41 = vector.broadcast %cst_21 : f32 to vector<18x128xf32>
    %42 = arith.maximumf %40, %41 : vector<18x128xf32>
    %cst_22 = arith.constant 5.000000e-01 : f32
    %43 = vector.broadcast %cst_22 : f32 to vector<18x128xf32>
    %44 = arith.mulf %43, %27 : vector<18x128xf32>
    %45 = arith.addf %44, %42 : vector<18x128xf32>
    %46 = tpu.iota {dimensions = array<i32: 0>} : vector<18x1xi32>
    %c1_i32 = arith.constant 1 : i32
    %47 = vector.broadcast %c1_i32 : i32 to vector<18x1xi32>
    %48 = arith.cmpi sge, %46, %47 : vector<18x1xi32>
    %c16_i32 = arith.constant 16 : i32
    %49 = vector.broadcast %c16_i32 : i32 to vector<18x1xi32>
    %50 = arith.cmpi sle, %46, %49 : vector<18x1xi32>
    %51 = arith.andi %48, %50 : vector<18x1xi1>
    %cst_23 = arith.constant 0.000000e+00 : f32
    %52 = vector.shape_cast %51 : vector<18x1xi1> to vector<18x1xi1>
    %53 = vector.broadcast %52 : vector<18x1xi1> to vector<18x128xi1>
    %54 = vector.broadcast %cst_23 : f32 to vector<18x128xf32>
    %55 = arith.select %53, %45, %54 : vector<18x128xi1>, vector<18x128xf32>
    %56 = arith.truncf %55 : vector<18x128xf32> to vector<18x128xbf16>
    %c0_24 = arith.constant 0 : index
    %c0_25 = arith.constant 0 : index
    %57 = vector.load %arg5[%c0_24, %c0_25] : memref<128x384xbf16, #tpu.memory_space<vmem>>, vector<128x384xbf16>
    %cst_26 = arith.constant dense<0.000000e+00> : vector<18x384xf32>
    %58 = tpu.matmul %56, %57, %cst_26 {dimension_numbers = #tpu.dot_dimension_numbers<[1], [0], [0], [1], [0, 0, 1, 1], [], []>} : vector<18x128xbf16>, vector<128x384xbf16>, vector<18x384xf32> -> vector<18x384xf32>
    %59 = vector.extract_strided_slice %58 {offsets = [0, 0], sizes = [16, 128], strides = [1, 1]} : vector<18x384xf32> to vector<16x128xf32>
    %60 = vector.extract_strided_slice %58 {offsets = [1, 128], sizes = [16, 128], strides = [1, 1]} : vector<18x384xf32> to vector<16x128xf32>
    %61 = arith.addf %59, %60 : vector<16x128xf32>
    %62 = vector.extract_strided_slice %58 {offsets = [2, 256], sizes = [16, 128], strides = [1, 1]} : vector<18x384xf32> to vector<16x128xf32>
    %63 = arith.addf %61, %62 : vector<16x128xf32>
    %c4 = arith.constant 4 : index
    %c0_27 = arith.constant 0 : index
    %64 = vector.load %arg8[%c4, %c0_27] : memref<8x128xf32, #tpu.memory_space<vmem>>, vector<1x128xf32>
    %65 = vector.broadcast %64 : vector<1x128xf32> to vector<16x128xf32>
    %66 = arith.mulf %63, %65 : vector<16x128xf32>
    %c5 = arith.constant 5 : index
    %c0_28 = arith.constant 0 : index
    %67 = vector.load %arg8[%c5, %c0_28] : memref<8x128xf32, #tpu.memory_space<vmem>>, vector<1x128xf32>
    %68 = vector.broadcast %67 : vector<1x128xf32> to vector<16x128xf32>
    %69 = arith.addf %66, %68 : vector<16x128xf32>
    %70 = vector.extract_strided_slice %1 {offsets = [2, 0], sizes = [16, 64], strides = [1, 1]} : vector<20x64xbf16> to vector<16x64xbf16>
    %c0_29 = arith.constant 0 : index
    %c0_30 = arith.constant 0 : index
    %71 = vector.load %arg6[%c0_29, %c0_30] : memref<64x128xbf16, #tpu.memory_space<vmem>>, vector<64x128xbf16>
    %cst_31 = arith.constant dense<0.000000e+00> : vector<16x128xf32>
    %72 = tpu.matmul %70, %71, %cst_31 {dimension_numbers = #tpu.dot_dimension_numbers<[1], [0], [0], [1], [0, 0, 1, 1], [], []>} : vector<16x64xbf16>, vector<64x128xbf16>, vector<16x128xf32> -> vector<16x128xf32>
    %c6 = arith.constant 6 : index
    %c0_32 = arith.constant 0 : index
    %73 = vector.load %arg8[%c6, %c0_32] : memref<8x128xf32, #tpu.memory_space<vmem>>, vector<1x128xf32>
    %74 = vector.broadcast %73 : vector<1x128xf32> to vector<16x128xf32>
    %75 = arith.mulf %72, %74 : vector<16x128xf32>
    %c7 = arith.constant 7 : index
    %c0_33 = arith.constant 0 : index
    %76 = vector.load %arg8[%c7, %c0_33] : memref<8x128xf32, #tpu.memory_space<vmem>>, vector<1x128xf32>
    %77 = vector.broadcast %76 : vector<1x128xf32> to vector<16x128xf32>
    %78 = arith.addf %75, %77 : vector<16x128xf32>
    %79 = arith.addf %69, %78 : vector<16x128xf32>
    %80 = arith.truncf %79 : vector<16x128xf32> to vector<16x128xbf16>
    %c0_34 = arith.constant 0 : index
    %c0_35 = arith.constant 0 : index
    %c0_36 = arith.constant 0 : index
    %81 = vector.load %arg9[%c0_34, %c0_35, %c0_36] : memref<1x16x128xbf16, #tpu.memory_space<vmem>>, vector<1x16x128xbf16>
    %82 = vector.shape_cast %81 : vector<1x16x128xbf16> to vector<16x128xbf16>
    %83 = vector.shape_cast %80 : vector<16x128xbf16> to vector<1x16x128xbf16>
    tpu.vector_store %arg9[%c0_34, %c0_35, %c0_36], %83 {strides = array<i32>} : memref<1x16x128xbf16, #tpu.memory_space<vmem>>, vector<1x16x128xbf16>,
    return
  }
  func.func @transform_0(%arg0: i32) -> (i32, i32, i32) {
    %c0_i32 = arith.constant 0 : i32
    %c0_i32_0 = arith.constant 0 : i32
    %c0_i32_1 = arith.constant 0 : i32
    return %arg0, %c0_i32, %c0_i32_0 : i32, i32, i32
  }
  func.func @transform_1(%arg0: i32) -> (i32, i32) {
    %c0_i32 = arith.constant 0 : i32
    %c0_i32_0 = arith.constant 0 : i32
    %c0_i32_1 = arith.constant 0 : i32
    return %c0_i32, %c0_i32_0 : i32, i32
  }
  func.func @transform_2(%arg0: i32) -> (i32, i32) {
    %c0_i32 = arith.constant 0 : i32
    %c0_i32_0 = arith.constant 0 : i32
    %c0_i32_1 = arith.constant 0 : i32
    return %c0_i32, %c0_i32_0 : i32, i32
  }
  func.func @transform_3(%arg0: i32) -> (i32, i32) {
    %c0_i32 = arith.constant 0 : i32
    %c0_i32_0 = arith.constant 0 : i32
    %c0_i32_1 = arith.constant 0 : i32
    return %c0_i32, %c0_i32_0 : i32, i32
  }
  func.func @transform_4(%arg0: i32) -> (i32, i32) {
    %c0_i32 = arith.constant 0 : i32
    %c0_i32_0 = arith.constant 0 : i32
    %c0_i32_1 = arith.constant 0 : i32
    return %c0_i32, %c0_i32_0 : i32, i32
  }
  func.func @transform_5(%arg0: i32) -> (i32, i32) {
    %c0_i32 = arith.constant 0 : i32
    %c0_i32_0 = arith.constant 0 : i32
    %c0_i32_1 = arith.constant 0 : i32
    return %c0_i32, %c0_i32_0 : i32, i32
  }
  func.func @transform_6(%arg0: i32) -> (i32, i32) {
    %c0_i32 = arith.constant 0 : i32
    %c0_i32_0 = arith.constant 0 : i32
    %c0_i32_1 = arith.constant 0 : i32
    return %c0_i32, %c0_i32_0 : i32, i32
  }
  func.func @transform_7(%arg0: i32) -> (i32, i32) {
    %c0_i32 = arith.constant 0 : i32
    %c0_i32_0 = arith.constant 0 : i32
    %c0_i32_1 = arith.constant 0 : i32
    return %c0_i32, %c0_i32_0 : i32, i32
  }
  func.func @transform_8(%arg0: i32) -> (i32, i32, i32) {
    %c0_i32 = arith.constant 0 : i32
    %c0_i32_0 = arith.constant 0 : i32
    %c0_i32_1 = arith.constant 0 : i32
    return %arg0, %c0_i32, %c0_i32_0 : i32, i32, i32
  }
}

</mosaic_0001>

<llo_original>
// kernel: tpu_custom_call.1
$region0: #{tpu_custom_call.1}
  #allocation0 [shape = 'u32[]', space=smem, size = 0x4, offset = 0x4, fixed_abs, tag = 'smem constant byte address 0x4 - core index']
  #allocation1 [shape = 'u32[72,128]{1,0:T(1,128)}', space=vmem, size = 0x9000, scoped, tag = 'internal scratch']
  %s0 = inlined_call_operand.vmem [shape: bf16[2,20,64], index: 0, kind: input, shape index: {}]
  %s1 = inlined_call_operand.hbm [shape: bf16[64,768], index: 1, kind: input, shape index: {}]
  %s2 = inlined_call_operand.hbm [shape: bf16[256,128], index: 2, kind: input, shape index: {}]
  %s3 = inlined_call_operand.hbm [shape: bf16[64,384], index: 3, kind: input, shape index: {}]
  %s4 = inlined_call_operand.hbm [shape: bf16[128,384], index: 4, kind: input, shape index: {}]
  %s5 = inlined_call_operand.vmem [shape: bf16[64,128], index: 5, kind: input, shape index: {}]
  %s6 = inlined_call_operand.vmem [shape: f32[2,256], index: 6, kind: input, shape index: {}]
  %s7 = inlined_call_operand.vmem [shape: f32[8,128], index: 7, kind: input, shape index: {}]
  %s8 = inlined_call_operand.hbm [shape: bf16[2,16,128], index: 8, kind: output, shape index: {}]
  %s9 = sld [smem:[#allocation0]]
  $region81: #{tpu_custom_call.1} parent=0
    _
  %s11 = ssub.s32 1, %s9
  %s12 = scalar_select 0, %s11, %s9
  $region1: #{tpu_custom_call.1} parent=0
    #allocation2 [shape = 'u8[98304]{0}', space=vmem, size = 0x18000, scoped, tag = 'input window, operand 1, single buffered']
    #allocation3 [shape = 's32[2]{0}', space=sflag, size = 0x8, scoped, tag = 'scoped memory for tpu_custom_call.1']
    #allocation4 [shape = 's32[2]{0}', space=sflag, size = 0x8, scoped, tag = 'scoped memory for tpu_custom_call.1']
    #allocation5 [shape = 'u8[65536]{0}', space=vmem, size = 0x10000, scoped, tag = 'input window, operand 2, single buffered']
    #allocation6 [shape = 's32[1]{0}', space=sflag, size = 0x4, scoped, tag = 'scoped memory for tpu_custom_call.1']
    #allocation7 [shape = 'u8[49152]{0}', space=vmem, size = 0xc000, scoped, tag = 'input window, operand 3, single buffered']
    #allocation8 [shape = 'u8[98304]{0}', space=vmem, size = 0x18000, scoped, tag = 'input window, operand 4, single buffered']
    #allocation9 [shape = 's32[1]{0}', space=sflag, size = 0x4, scoped, tag = 'scoped memory for tpu_custom_call.1']
    #allocation10 [shape = 'u8[8192]{0}', space=vmem, size = 0x2000, scoped, tag = 'output window, operand 0']
    %13 = vsyncpa [#allocation3], 0
    %14 = vsyncpa [#allocation6], 0
    %15 = vsyncpa [#allocation9], 0
    %16 = vsyncpa [#allocation4], 0
    %s17 = scalar_lea.sflag [#allocation4], 1
    %18 = vsyncpa %s17, 0
    loop: start=0, step=1, limit=4
    $region2: #{tpu_custom_call.1} parent=1 // loop_pre_header
      _
    $region3: #{tpu_custom_call.1} parent=1 // loop_header
      %s20 = sphi 0, %s24
      %p21 = scmp.ge.s32.totalorder %s20, 4
      %s30 = sphi 0, %s32
      %s33 = sphi 0, %s30
      %s34 = sphi 0, %s33
      %s50 = sphi 0, %s34
      %s54 = sphi 0, %s54
      %s56 = sphi 0, %s54
      %s57 = sphi 0, %s56
      %s71 = sphi 0, %s57
      %s75 = sphi 0, %s75
      %s77 = sphi 0, %s75
      %s78 = sphi 0, %s77
      %s92 = sphi 0, %s78
      %s96 = sphi 0, %s96
      %s98 = sphi 0, %s96
      %s99 = sphi 0, %s98
      %s113 = sphi 0, %s99
      %s117 = sphi 0, %s117
      %s119 = sphi 0, %s117
      %s120 = sphi 0, %s119
      %s134 = sphi 0, %s120
      %s138 = sphi 0, %s138
      %s140 = sphi 0, %s138
      %s141 = sphi 0, %s140
      %s155 = sphi 0, %s141
      %s159 = sphi 0, %s159
      %s161 = sphi 0, %s159
      %s162 = sphi 0, %s161
      %s176 = sphi 0, %s162
      %s180 = sphi 0, %s180
      %s182 = sphi 0, %s180
      %s183 = sphi 0, %s182
      %s197 = sphi 0, %s183
      %s203 = sphi 0, %s205
      %s206 = sphi 0, %s203
      %s207 = sphi 0, %s206
      %s223 = sphi 0, %s207
    $region4: #{tpu_custom_call.1} parent=1 // loop_header_branch
      %23 = sbr.rel (%p21) target = $region8
    $region5: #{tpu_custom_call.1} parent=1 // loop_body
      %s25 = ssub.s32 %s20, 1
      %s26 = ssub.s32 %s20, 2
      %s27 = sadd.s32 %s20, 1
      %s28 = ssub.s32 %s20, %s27
      %p29 = scmp.eq.s32.totalorder %s28, 0
      %s31 = sadd.s32 %s30, 1
      %s32 = scalar_select %p29, %s30, %s31
      %p35 = pneg %p29
      %p36 = scmp.eq.s32.totalorder %s20, 1
      %p37 = por %p35, %p36
      %p38 = scmp.ne.s32.totalorder %s30, %s33
      %p39 = scmp.eq.s32.totalorder %s20, 0
      %p40 = por %p38, %p39
      %p41 = scmp.ne.s32.totalorder %s30, %s33
      %p42 = scmp.eq.s32.totalorder %s25, 1
      %p43 = por %p41, %p42
      %p44 = scmp.ne.s32.totalorder %s33, %s34
      %p45 = scmp.eq.s32.totalorder %s25, 0
      %p46 = por %p44, %p45
      %p47 = scmp.ne.s32.totalorder %s33, %s34
      %p48 = scmp.eq.s32.totalorder %s26, 1
      %p49 = por %p47, %p48
      %p51 = scmp.ne.s32.totalorder %s34, %s50
      %p52 = scmp.eq.s32.totalorder %s26, 0
      %p53 = por %p51, %p52
      %s55 = sadd.s32 %s54, 1
      %p58 = scmp.eq.s32.totalorder %s20, 1
      %p59 = scmp.ne.s32.totalorder %s54, %s56
      %p60 = scmp.eq.s32.totalorder %s20, 0
      %p61 = por %p59, %p60
      %p62 = scmp.ne.s32.totalorder %s54, %s56
      %p63 = scmp.eq.s32.totalorder %s25, 1
      %p64 = por %p62, %p63
      %p65 = scmp.ne.s32.totalorder %s56, %s57
      %p66 = scmp.eq.s32.totalorder %s25, 0
      %p67 = por %p65, %p66
      %p68 = scmp.ne.s32.totalorder %s56, %s57
      %p69 = scmp.eq.s32.totalorder %s26, 1
      %p70 = por %p68, %p69
      %p72 = scmp.ne.s32.totalorder %s57, %s71
      %p73 = scmp.eq.s32.totalorder %s26, 0
      %p74 = por %p72, %p73
      %s76 = sadd.s32 %s75, 1
      %p79 = scmp.eq.s32.totalorder %s20, 1
      %p80 = scmp.ne.s32.totalorder %s75, %s77
      %p81 = scmp.eq.s32.totalorder %s20, 0
      %p82 = por %p80, %p81
      %p83 = scmp.ne.s32.totalorder %s75, %s77
      %p84 = scmp.eq.s32.totalorder %s25, 1
      %p85 = por %p83, %p84
      %p86 = scmp.ne.s32.totalorder %s77, %s78
      %p87 = scmp.eq.s32.totalorder %s25, 0
      %p88 = por %p86, %p87
      %p89 = scmp.ne.s32.totalorder %s77, %s78
      %p90 = scmp.eq.s32.totalorder %s26, 1
      %p91 = por %p89, %p90
      %p93 = scmp.ne.s32.totalorder %s78, %s92
      %p94 = scmp.eq.s32.totalorder %s26, 0
      %p95 = por %p93, %p94
      %s97 = sadd.s32 %s96, 1
      %p100 = scmp.eq.s32.totalorder %s20, 1
      %p101 = scmp.ne.s32.totalorder %s96, %s98
      %p102 = scmp.eq.s32.totalorder %s20, 0
      %p103 = por %p101, %p102
      %p104 = scmp.ne.s32.totalorder %s96, %s98
      %p105 = scmp.eq.s32.totalorder %s25, 1
      %p106 = por %p104, %p105
      %p107 = scmp.ne.s32.totalorder %s98, %s99
      %p108 = scmp.eq.s32.totalorder %s25, 0
      %p109 = por %p107, %p108
      %p110 = scmp.ne.s32.totalorder %s98, %s99
      %p111 = scmp.eq.s32.totalorder %s26, 1
      %p112 = por %p110, %p111
      %p114 = scmp.ne.s32.totalorder %s99, %s113
      %p115 = scmp.eq.s32.totalorder %s26, 0
      %p116 = por %p114, %p115
      %s118 = sadd.s32 %s117, 1
      %p121 = scmp.eq.s32.totalorder %s20, 1
      %p122 = scmp.ne.s32.totalorder %s117, %s119
      %p123 = scmp.eq.s32.totalorder %s20, 0
      %p124 = por %p122, %p123
      %p125 = scmp.ne.s32.totalorder %s117, %s119
      %p126 = scmp.eq.s32.totalorder %s25, 1
      %p127 = por %p125, %p126
      %p128 = scmp.ne.s32.totalorder %s119, %s120
      %p129 = scmp.eq.s32.totalorder %s25, 0
      %p130 = por %p128, %p129
      %p131 = scmp.ne.s32.totalorder %s119, %s120
      %p132 = scmp.eq.s32.totalorder %s26, 1
      %p133 = por %p131, %p132
      %p135 = scmp.ne.s32.totalorder %s120, %s134
      %p136 = scmp.eq.s32.totalorder %s26, 0
      %p137 = por %p135, %p136
      %s139 = sadd.s32 %s138, 1
      %p142 = scmp.eq.s32.totalorder %s20, 1
      %p143 = scmp.ne.s32.totalorder %s138, %s140
      %p144 = scmp.eq.s32.totalorder %s20, 0
      %p145 = por %p143, %p144
      %p146 = scmp.ne.s32.totalorder %s138, %s140
      %p147 = scmp.eq.s32.totalorder %s25, 1
      %p148 = por %p146, %p147
      %p149 = scmp.ne.s32.totalorder %s140, %s141
      %p150 = scmp.eq.s32.totalorder %s25, 0
      %p151 = por %p149, %p150
      %p152 = scmp.ne.s32.totalorder %s140, %s141
      %p153 = scmp.eq.s32.totalorder %s26, 1
      %p154 = por %p152, %p153
      %p156 = scmp.ne.s32.totalorder %s141, %s155
      %p157 = scmp.eq.s32.totalorder %s26, 0
      %p158 = por %p156, %p157
      %s160 = sadd.s32 %s159, 1
      %p163 = scmp.eq.s32.totalorder %s20, 1
      %p164 = scmp.ne.s32.totalorder %s159, %s161
      %p165 = scmp.eq.s32.totalorder %s20, 0
      %p166 = por %p164, %p165
      %p167 = scmp.ne.s32.totalorder %s159, %s161
      %p168 = scmp.eq.s32.totalorder %s25, 1
      %p169 = por %p167, %p168
      %p170 = scmp.ne.s32.totalorder %s161, %s162
      %p171 = scmp.eq.s32.totalorder %s25, 0
      %p172 = por %p170, %p171
      %p173 = scmp.ne.s32.totalorder %s161, %s162
      %p174 = scmp.eq.s32.totalorder %s26, 1
      %p175 = por %p173, %p174
      %p177 = scmp.ne.s32.totalorder %s162, %s176
      %p178 = scmp.eq.s32.totalorder %s26, 0
      %p179 = por %p177, %p178
      %s181 = sadd.s32 %s180, 1
      %p184 = scmp.eq.s32.totalorder %s20, 1
      %p185 = scmp.ne.s32.totalorder %s180, %s182
      %p186 = scmp.eq.s32.totalorder %s20, 0
      %p187 = por %p185, %p186
      %p188 = scmp.ne.s32.totalorder %s180, %s182
      %p189 = scmp.eq.s32.totalorder %s25, 1
      %p190 = por %p188, %p189
      %p191 = scmp.ne.s32.totalorder %s182, %s183
      %p192 = scmp.eq.s32.totalorder %s25, 0
      %p193 = por %p191, %p192
      %p194 = scmp.ne.s32.totalorder %s182, %s183
      %p195 = scmp.eq.s32.totalorder %s26, 1
      %p196 = por %p194, %p195
      %p198 = scmp.ne.s32.totalorder %s183, %s197
      %p199 = scmp.eq.s32.totalorder %s26, 0
      %p200 = por %p198, %p199
      %s201 = ssub.s32 %s20, %s27
      %p202 = scmp.eq.s32.totalorder %s201, 0
      %s204 = sadd.s32 %s203, 1
      %s205 = scalar_select %p202, %s203, %s204
      %p208 = pneg %p202
      %p209 = scmp.eq.s32.totalorder %s20, 1
      %p210 = por %p208, %p209
      %p211 = scmp.ne.s32.totalorder %s203, %s206
      %p212 = scmp.eq.s32.totalorder %s20, 0
      %p213 = por %p211, %p212
      %p214 = scmp.ne.s32.totalorder %s203, %s206
      %p215 = scmp.eq.s32.totalorder %s25, 1
      %p216 = por %p214, %p215
      %p217 = scmp.ne.s32.totalorder %s206, %s207
      %p218 = scmp.eq.s32.totalorder %s25, 0
      %p219 = por %p217, %p218
      %p220 = scmp.ne.s32.totalorder %s206, %s207
      %p221 = scmp.eq.s32.totalorder %s26, 1
      %p222 = por %p220, %p221
      %p224 = scmp.ne.s32.totalorder %s207, %s223
      %p225 = scmp.eq.s32.totalorder %s26, 0
      %p226 = por %p224, %p225
      %p227 = scmp.le.s32.totalorder 1, %s20
      %p228 = scmp.lt.s32.totalorder %s20, 3
      %p229 = pnand %p227, %p228
      %p230 = pneg %p229
      // Predicated region
      $region9: #{tpu_custom_call.1} parent=5 // pred_check
        _
      $region10: #{tpu_custom_call.1} parent=5 // pred_check_branch
        %232 = sbr.rel (%p229) target = $region12
      $region11: #{tpu_custom_call.1} parent=5 // pred_region
        %s233 = ssub.s32 %s20, 1
        // Predicated region
        $region13: #{tpu_custom_call.1} parent=11 // pred_check
          %p234 = pneg %p67
        $region14: #{tpu_custom_call.1} parent=11 // pred_check_branch
          %236 = sbr.rel (%p234) target = $region16
        $region15: #{tpu_custom_call.1} parent=11 // pred_region
          %238 = vsyncadd [#allocation3], 0
          %s239 = sshll.u32 %s1, 4
          %s240 = int_to_ptr.hbm [resolvable:$true] %s239
          %s241 = sshll.u32 [#allocation2], 4
          %s242 = int_to_ptr.vmem [resolvable:$true] %s241
          %247 = dma.hbm_to_vmem [thread:$0]  %s240, 3072, %s242, [#allocation3], 384, 384, 24
        $region16: #{tpu_custom_call.1} parent=11 // pred_fallthru
          _
        // Predicated region
        $region17: #{tpu_custom_call.1} parent=11 // pred_check
          %p248 = pneg %p88
        $region18: #{tpu_custom_call.1} parent=11 // pred_check_branch
          %250 = sbr.rel (%p248) target = $region20
        $region19: #{tpu_custom_call.1} parent=11 // pred_region
          %252 = vsyncadd [#allocation6], 0
          %s253 = sshll.u32 %s2, 4
          %s254 = int_to_ptr.hbm [resolvable:$true] %s253
          %s255 = sshll.u32 [#allocation5], 4
          %s256 = int_to_ptr.vmem [resolvable:$true] %s255
          %261 = dma.hbm_to_vmem [thread:$0]  %s254, 2048, %s256, [#allocation6], 64, 64, 4
        $region20: #{tpu_custom_call.1} parent=11 // pred_fallthru
          _
        // Predicated region
        $region21: #{tpu_custom_call.1} parent=11 // pred_check
          %p262 = pneg %p109
        $region22: #{tpu_custom_call.1} parent=11 // pred_check_branch
          %264 = sbr.rel (%p262) target = $region24
        $region23: #{tpu_custom_call.1} parent=11 // pred_region
          %266 = vsyncadd [#allocation6], 0
          %s267 = sshll.u32 %s3, 4
          %s268 = int_to_ptr.hbm [resolvable:$true] %s267
          %s269 = sshll.u32 [#allocation7], 4
          %s270 = int_to_ptr.vmem [resolvable:$true] %s269
          %275 = dma.hbm_to_vmem [thread:$0]  %s268, 1536, %s270, [#allocation6], 192, 192, 12
        $region24: #{tpu_custom_call.1} parent=11 // pred_fallthru
          _
        // Predicated region
        $region25: #{tpu_custom_call.1} parent=11 // pred_check
          %p276 = pneg %p130
        $region26: #{tpu_custom_call.1} parent=11 // pred_check_branch
          %278 = sbr.rel (%p276) target = $region28
        $region27: #{tpu_custom_call.1} parent=11 // pred_region
          %280 = vsyncadd [#allocation9], 0
          %s281 = sshll.u32 %s4, 4
          %s282 = int_to_ptr.hbm [resolvable:$true] %s281
          %s283 = sshll.u32 [#allocation8], 4
          %s284 = int_to_ptr.vmem [resolvable:$true] %s283
          %289 = dma.hbm_to_vmem [thread:$0]  %s282, 3072, %s284, [#allocation9], 192, 192, 12
        $region28: #{tpu_custom_call.1} parent=11 // pred_fallthru
          _
        // Predicated region
        $region29: #{tpu_custom_call.1} parent=11 // pred_check
          %p290 = pneg %p151
        $region30: #{tpu_custom_call.1} parent=11 // pred_check_branch
          %292 = sbr.rel (%p290) target = $region32
        $region31: #{tpu_custom_call.1} parent=11 // pred_region
          _
        $region32: #{tpu_custom_call.1} parent=11 // pred_fallthru
          _
        // Predicated region
        $region33: #{tpu_custom_call.1} parent=11 // pred_check
          %p293 = pneg %p172
        $region34: #{tpu_custom_call.1} parent=11 // pred_check_branch
          %295 = sbr.rel (%p293) target = $region36
        $region35: #{tpu_custom_call.1} parent=11 // pred_region
          _
        $region36: #{tpu_custom_call.1} parent=11 // pred_fallthru
          _
        // Predicated region
        $region37: #{tpu_custom_call.1} parent=11 // pred_check
          %p296 = pneg %p193
        $region38: #{tpu_custom_call.1} parent=11 // pred_check_branch
          %298 = sbr.rel (%p296) target = $region40
        $region39: #{tpu_custom_call.1} parent=11 // pred_region
          _
        $region40: #{tpu_custom_call.1} parent=11 // pred_fallthru
          _
      $region12: #{tpu_custom_call.1} parent=5 // pred_fallthru
        _
      %p299 = scmp.lt.s32.totalorder %s20, 2
      // Predicated region
      $region41: #{tpu_custom_call.1} parent=5 // pred_check
        %p300 = pneg %p299
      $region42: #{tpu_custom_call.1} parent=5 // pred_check_branch
        %302 = sbr.rel (%p300) target = $region44
      $region43: #{tpu_custom_call.1} parent=5 // pred_region
        // Predicated region
        $region45: #{tpu_custom_call.1} parent=43 // pred_check
          %p303 = pneg %p40
        $region46: #{tpu_custom_call.1} parent=43 // pred_check_branch
          %305 = sbr.rel (%p303) target = $region48
        $region47: #{tpu_custom_call.1} parent=43 // pred_region
          %p306 = scmp.lt.s32.totalorder %s20, 1
          %s307 = scalar_select %p306, %s20, 1
          %s308 = smul.addr %s307, 3
          %s309 = smul.addr %s308, 4
          %s310 = scalar_lea.vmem %s0, %s309
        $region48: #{tpu_custom_call.1} parent=43 // pred_fallthru
          _
      $region44: #{tpu_custom_call.1} parent=5 // pred_fallthru
        _
      %p311 = scmp.le.s32.totalorder 1, %s20
      %p312 = scmp.lt.s32.totalorder %s20, 3
      %p313 = pnand %p311, %p312
      %p314 = pneg %p313
      // Predicated region
      $region49: #{tpu_custom_call.1} parent=5 // pred_check
        _
      $region50: #{tpu_custom_call.1} parent=5 // pred_check_branch
        %316 = sbr.rel (%p313) target = $region52
      $region51: #{tpu_custom_call.1} parent=5 // pred_region
        %s317 = ssub.s32 %s20, 1
        // Predicated region
        $region53: #{tpu_custom_call.1} parent=51 // pred_check
          %p318 = pneg %p67
        $region54: #{tpu_custom_call.1} parent=51 // pred_check_branch
          %320 = sbr.rel (%p318) target = $region56
        $region55: #{tpu_custom_call.1} parent=51 // pred_region
          %322 = dma.done [#allocation3], 3072
        $region56: #{tpu_custom_call.1} parent=51 // pred_fallthru
          _
        // Predicated region
        $region57: #{tpu_custom_call.1} parent=51 // pred_check
          %p323 = pneg %p88
        $region58: #{tpu_custom_call.1} parent=51 // pred_check_branch
          %325 = sbr.rel (%p323) target = $region60
        $region59: #{tpu_custom_call.1} parent=51 // pred_region
          %327 = dma.done [#allocation6], 2048
        $region60: #{tpu_custom_call.1} parent=51 // pred_fallthru
          _
        // Predicated region
        $region61: #{tpu_custom_call.1} parent=51 // pred_check
          %p328 = pneg %p109
        $region62: #{tpu_custom_call.1} parent=51 // pred_check_branch
          %330 = sbr.rel (%p328) target = $region64
        $region63: #{tpu_custom_call.1} parent=51 // pred_region
          %332 = dma.done [#allocation6], 1536
        $region64: #{tpu_custom_call.1} parent=51 // pred_fallthru
          _
        // Predicated region
        $region65: #{tpu_custom_call.1} parent=51 // pred_check
          %p333 = pneg %p130
        $region66: #{tpu_custom_call.1} parent=51 // pred_check_branch
          %335 = sbr.rel (%p333) target = $region68
        $region67: #{tpu_custom_call.1} parent=51 // pred_region
          %337 = dma.done [#allocation9], 3072
        $region68: #{tpu_custom_call.1} parent=51 // pred_fallthru
          _
        %p338 = scmp.lt.s32.totalorder %s25, 1
        %s339 = scalar_select %p338, %s25, 1
        %s340 = smul.addr %s339, 3
        %s341 = smul.addr %s340, 4
        %s342 = scalar_lea.vmem %s0, %s341
        %p343 = pneg %p46
        %p344 = pneg %p43
        %p345 = pneg %p67
        %p346 = pneg %p64
        %p347 = pneg %p88
        %p348 = pneg %p85
        %p349 = pneg %p109
        %p350 = pneg %p106
        %p351 = pneg %p130
        %p352 = pneg %p127
        %p353 = pneg %p151
        %p354 = pneg %p148
        %p355 = pneg %p172
        %p356 = pneg %p169
        %p357 = pneg %p193
        %p358 = pneg %p190
        %p359 = pneg %p219
        %p360 = pneg %p216
        %s361 = sand.u32 %s206, 1
        %s362 = scalar_lea.sflag [#allocation4], %s361
        %s363 = sand.u32 %s206, 1
        %s364 = smul.addr %s363, 8
        %s365 = scalar_lea.vmem [#allocation10], %s364
        %p366 = scmp.lt.s32.totalorder %s25, 1
        %s367 = scalar_select %p366, %s25, 1
        %s368 = smul.addr %s367, 3
        %s369 = smul.addr %s368, 4
        %s370 = scalar_lea.vmem %s0, %s369
        %v372 = vld [vmem:[%s370] sm:$0xf]
        %v373 = vld [vmem:[%s370 + $0x4] sm:$0xf]
        %v374 = vld [vmem:[%s370 + $0x8] sm:$0x3]
        %v375 = vld [vmem:[#allocation2] sm:$0xff]
        %v376 = vld [vmem:[#allocation2 + $0x8] sm:$0xff]
        %v377 = vld [vmem:[#allocation2 + $0x10] sm:$0xff]
        %v378 = vld [vmem:[#allocation2 + $0x18] sm:$0xff]
        %v379 = vld [vmem:[#allocation2 + $0x20] sm:$0xff]
        %v380 = vld [vmem:[#allocation2 + $0x28] sm:$0xff]
        %v381 = vld [vmem:[#allocation2 + $0x30] sm:$0xff]
        %v382 = vld [vmem:[#allocation2 + $0x38] sm:$0xff]
        %v383 = vld [vmem:[#allocation2 + $0x40] sm:$0xff]
        %v384 = vld [vmem:[#allocation2 + $0x48] sm:$0xff]
        %v385 = vld [vmem:[#allocation2 + $0x50] sm:$0xff]
        %v386 = vld [vmem:[#allocation2 + $0x58] sm:$0xff]
        %v387 = vld [vmem:[#allocation2 + $0x60] sm:$0xff]
        %v388 = vld [vmem:[#allocation2 + $0x68] sm:$0xff]
        %v389 = vld [vmem:[#allocation2 + $0x70] sm:$0xff]
        %v390 = vld [vmem:[#allocation2 + $0x78] sm:$0xff]
        %v391 = vld [vmem:[#allocation2 + $0x80] sm:$0xff]
        %v392 = vld [vmem:[#allocation2 + $0x88] sm:$0xff]
        %v393 = vld [vmem:[#allocation2 + $0x90] sm:$0xff]
        %v394 = vld [vmem:[#allocation2 + $0x98] sm:$0xff]
        %v395 = vld [vmem:[#allocation2 + $0xa0] sm:$0xff]
        %v396 = vld [vmem:[#allocation2 + $0xa8] sm:$0xff]
        %v397 = vld [vmem:[#allocation2 + $0xb0] sm:$0xff]
        %v398 = vld [vmem:[#allocation2 + $0xb8] sm:$0xff]
        %v402 = vunpack.c.l.b16 %v372
        %v403 = vunpack.c.l.b16 %v373
        %v404 = vunpack.c.l.b16 %v374
        %v405 = vpack.c.b16 %v403, %v402
        %v406 = vpack.c.b16 %v404, %v404
        %v431 = vunpack.c.l.b16 %v375
        %v432 = vunpack.c.h.b16 %v375
        %v433 = vunpack.c.l.b16 %v376
        %v434 = vunpack.c.h.b16 %v376
        %v435 = vunpack.c.l.b16 %v377
        %v436 = vunpack.c.h.b16 %v377
        %v437 = vunpack.c.l.b16 %v378
        %v438 = vunpack.c.h.b16 %v378
        %v439 = vunpack.c.l.b16 %v379
        %v440 = vunpack.c.h.b16 %v379
        %v441 = vunpack.c.l.b16 %v380
        %v442 = vunpack.c.h.b16 %v380
        %v443 = vunpack.c.l.b16 %v381
        %v444 = vunpack.c.h.b16 %v381
        %v445 = vunpack.c.l.b16 %v382
        %v446 = vunpack.c.h.b16 %v382
        %v447 = vunpack.c.l.b16 %v383
        %v448 = vunpack.c.h.b16 %v383
        %v449 = vunpack.c.l.b16 %v384
        %v450 = vunpack.c.h.b16 %v384
        %v451 = vunpack.c.l.b16 %v385
        %v452 = vunpack.c.h.b16 %v385
        %v453 = vunpack.c.l.b16 %v386
        %v454 = vunpack.c.h.b16 %v386
        %v455 = vunpack.c.l.b16 %v387
        %v456 = vunpack.c.h.b16 %v387
        %v457 = vunpack.c.l.b16 %v388
        %v458 = vunpack.c.h.b16 %v388
        %v459 = vunpack.c.l.b16 %v389
        %v460 = vunpack.c.h.b16 %v389
        %v461 = vunpack.c.l.b16 %v390
        %v462 = vunpack.c.h.b16 %v390
        %v463 = vunpack.c.l.b16 %v391
        %v464 = vunpack.c.h.b16 %v391
        %v465 = vunpack.c.l.b16 %v392
        %v466 = vunpack.c.h.b16 %v392
        %v467 = vunpack.c.l.b16 %v393
        %v468 = vunpack.c.h.b16 %v393
        %v469 = vunpack.c.l.b16 %v394
        %v470 = vunpack.c.h.b16 %v394
        %v471 = vunpack.c.l.b16 %v395
        %v472 = vunpack.c.h.b16 %v395
        %v473 = vunpack.c.l.b16 %v396
        %v474 = vunpack.c.h.b16 %v396
        %v475 = vunpack.c.l.b16 %v397
        %v476 = vunpack.c.h.b16 %v397
        %v477 = vunpack.c.l.b16 %v398
        %v478 = vunpack.c.h.b16 %v398
        %v479 = vpack.c.b16 %v437, %v431
        %v480 = vpack.c.b16 %v438, %v432
        %v481 = vpack.c.b16 %v439, %v433
        %v482 = vpack.c.b16 %v440, %v434
        %v483 = vpack.c.b16 %v441, %v435
        %v484 = vpack.c.b16 %v442, %v436
        %v485 = vpack.c.b16 %v449, %v443
        %v486 = vpack.c.b16 %v450, %v444
        %v487 = vpack.c.b16 %v451, %v445
        %v488 = vpack.c.b16 %v452, %v446
        %v489 = vpack.c.b16 %v453, %v447
        %v490 = vpack.c.b16 %v454, %v448
        %v491 = vpack.c.b16 %v461, %v455
        %v492 = vpack.c.b16 %v462, %v456
        %v493 = vpack.c.b16 %v463, %v457
        %v494 = vpack.c.b16 %v464, %v458
        %v495 = vpack.c.b16 %v465, %v459
        %v496 = vpack.c.b16 %v466, %v460
        %v497 = vpack.c.b16 %v473, %v467
        %v498 = vpack.c.b16 %v474, %v468
        %v499 = vpack.c.b16 %v475, %v469
        %v500 = vpack.c.b16 %v476, %v470
        %v501 = vpack.c.b16 %v477, %v471
        %v502 = vpack.c.b16 %v478, %v472
        %vm527 = vcmask 523264
        %v529 = vsel %vm527, %v405, 0
        %v532 = vsel %vm527, %v406, 0
        %534 = vmatpush.bf16.msra.mxu0 0
        %535 = vmatpush.bf16.msra.mxu0 0
        %536 = vmatpush.bf16.msra.mxu0 0
        %537 = vmatpush.bf16.msra.mxu0 0
        %538 = vmatpush.bf16.msra.mxu0 %v497
        %539 = vmatpush.bf16.msra.mxu0 %v491
        %540 = vmatpush.bf16.msra.mxu0 %v485
        %541 = vmatpush.bf16.msra.mxu0 %v479
        %542 = vmatmul.bf16.gmra.mxu0 %v529
        %v543 = vpop.f32.mrf.mxu0
        %v544 = vadd.f32 0.0, %v543
        %v545 = vpop.f32.mrf.mxu0
        %v546 = vadd.f32 0.0, %v545
        %547 = vmatmul.bf16.gmra.mxu0 %v532
        %v548 = vpop.f32.mrf.mxu0
        %v549 = vadd.f32 0.0, %v548
        %v550 = vpop.f32.mrf.mxu0
        %551 = vdwg.mxu0
        %552 = vmatpush.bf16.msra.mxu0 0
        %553 = vmatpush.bf16.msra.mxu0 0
        %554 = vmatpush.bf16.msra.mxu0 0
        %555 = vmatpush.bf16.msra.mxu0 0
        %556 = vmatpush.bf16.msra.mxu0 %v498
        %557 = vmatpush.bf16.msra.mxu0 %v492
        %558 = vmatpush.bf16.msra.mxu0 %v486
        %559 = vmatpush.bf16.msra.mxu0 %v480
        %560 = vmatmul.bf16.gmra.mxu0 %v529
        %v561 = vpop.f32.mrf.mxu0
        %v562 = vadd.f32 0.0, %v561
        %v563 = vpop.f32.mrf.mxu0
        %v564 = vadd.f32 0.0, %v563
        %565 = vmatmul.bf16.gmra.mxu0 %v532
        %v566 = vpop.f32.mrf.mxu0
        %v567 = vadd.f32 0.0, %v566
        %v568 = vpop.f32.mrf.mxu0
        %569 = vdwg.mxu0
        %570 = vmatpush.bf16.msra.mxu0 0
        %571 = vmatpush.bf16.msra.mxu0 0
        %572 = vmatpush.bf16.msra.mxu0 0
        %573 = vmatpush.bf16.msra.mxu0 0
        %574 = vmatpush.bf16.msra.mxu0 %v499
        %575 = vmatpush.bf16.msra.mxu0 %v493
        %576 = vmatpush.bf16.msra.mxu0 %v487
        %577 = vmatpush.bf16.msra.mxu0 %v481
        %578 = vmatmul.bf16.gmra.mxu0 %v529
        %v579 = vpop.f32.mrf.mxu0
        %v580 = vadd.f32 0.0, %v579
        %v581 = vpop.f32.mrf.mxu0
        %v582 = vadd.f32 0.0, %v581
        %583 = vmatmul.bf16.gmra.mxu0 %v532
        %v584 = vpop.f32.mrf.mxu0
        %v585 = vadd.f32 0.0, %v584
        %v586 = vpop.f32.mrf.mxu0
        %587 = vdwg.mxu0
        %588 = vmatpush.bf16.msra.mxu0 0
        %589 = vmatpush.bf16.msra.mxu0 0
        %590 = vmatpush.bf16.msra.mxu0 0
        %591 = vmatpush.bf16.msra.mxu0 0
        %592 = vmatpush.bf16.msra.mxu0 %v500
        %593 = vmatpush.bf16.msra.mxu0 %v494
        %594 = vmatpush.bf16.msra.mxu0 %v488
        %595 = vmatpush.bf16.msra.mxu0 %v482
        %596 = vmatmul.bf16.gmra.mxu0 %v529
        %v597 = vpop.f32.mrf.mxu0
        %v598 = vadd.f32 0.0, %v597
        %v599 = vpop.f32.mrf.mxu0
        %v600 = vadd.f32 0.0, %v599
        %601 = vmatmul.bf16.gmra.mxu0 %v532
        %v602 = vpop.f32.mrf.mxu0
        %v603 = vadd.f32 0.0, %v602
        %v604 = vpop.f32.mrf.mxu0
        %605 = vdwg.mxu0
        %606 = vmatpush.bf16.msra.mxu0 0
        %607 = vmatpush.bf16.msra.mxu0 0
        %608 = vmatpush.bf16.msra.mxu0 0
        %609 = vmatpush.bf16.msra.mxu0 0
        %610 = vmatpush.bf16.msra.mxu0 %v501
        %611 = vmatpush.bf16.msra.mxu0 %v495
        %612 = vmatpush.bf16.msra.mxu0 %v489
        %613 = vmatpush.bf16.msra.mxu0 %v483
        %614 = vmatmul.bf16.gmra.mxu0 %v529
        %v615 = vpop.f32.mrf.mxu0
        %v616 = vadd.f32 0.0, %v615
        %v617 = vpop.f32.mrf.mxu0
        %v618 = vadd.f32 0.0, %v617
        %619 = vmatmul.bf16.gmra.mxu0 %v532
        %v620 = vpop.f32.mrf.mxu0
        %v621 = vadd.f32 0.0, %v620
        %v622 = vpop.f32.mrf.mxu0
        %623 = vdwg.mxu0
        %624 = vmatpush.bf16.msra.mxu0 0
        %625 = vmatpush.bf16.msra.mxu0 0
        %626 = vmatpush.bf16.msra.mxu0 0
        %627 = vmatpush.bf16.msra.mxu0 0
        %628 = vmatpush.bf16.msra.mxu0 %v502
        %629 = vmatpush.bf16.msra.mxu0 %v496
        %630 = vmatpush.bf16.msra.mxu0 %v490
        %631 = vmatpush.bf16.msra.mxu0 %v484
        %632 = vmatmul.bf16.gmra.mxu0 %v529
        %v633 = vpop.f32.mrf.mxu0
        %v634 = vadd.f32 0.0, %v633
        %v635 = vpop.f32.mrf.mxu0
        %v636 = vadd.f32 0.0, %v635
        %637 = vmatmul.bf16.gmra.mxu0 %v532
        %v638 = vpop.f32.mrf.mxu0
        %v639 = vadd.f32 0.0, %v638
        %v640 = vpop.f32.mrf.mxu0
        %641 = vdwg.mxu0
        %vm648 = vcmask 1046528
        %v649 = vrot.slane %v580, 1
        %v650 = vrot.slane %v582, 1
        %v651 = vsel %vm648, %v649, %v650
        %v652 = vrot.slane %v598, 1
        %v653 = vrot.slane %v600, 1
        %v654 = vsel %vm648, %v652, %v653
        %v655 = vrot.slane %v585, 1
        %v656 = vsel %vm648, %v650, %v655
        %v657 = vrot.slane %v603, 1
        %v658 = vsel %vm648, %v653, %v657
        %v665 = vadd.f32 %v544, %v651
        %v666 = vadd.f32 %v562, %v654
        %v667 = vadd.f32 %v546, %v656
        %v668 = vadd.f32 %v564, %v658
        %v669 = vadd.f32 %v549, %v655
        %v670 = vadd.f32 %v567, %v657
        %vm677 = vcmask 1045504
        %v678 = vrot.slane %v616, 2
        %v679 = vrot.slane %v618, 2
        %v680 = vsel %vm677, %v678, %v679
        %v681 = vrot.slane %v634, 2
        %v682 = vrot.slane %v636, 2
        %v683 = vsel %vm677, %v681, %v682
        %v684 = vrot.slane %v621, 2
        %v685 = vsel %vm677, %v679, %v684
        %v686 = vrot.slane %v639, 2
        %v687 = vsel %vm677, %v682, %v686
        %v694 = vadd.f32 %v665, %v680
        %v695 = vadd.f32 %v666, %v683
        %v696 = vadd.f32 %v667, %v685
        %v697 = vadd.f32 %v668, %v687
        %v698 = vadd.f32 %v669, %v684
        %v699 = vadd.f32 %v670, %v686
        %v700 = vld [vmem:[%s6] ss:$2 sm:$0x3]
        %v702 = vperm.slane %v700, 0
        %v703 = vperm.slane %v700, 1
        %v706 = vmul.f32 %v694, %v702
        %v707 = vmul.f32 %v695, %v703
        %v708 = vmul.f32 %v696, %v702
        %v709 = vmul.f32 %v697, %v703
        %v710 = vmul.f32 %v698, %v702
        %v711 = vmul.f32 %v699, %v703
        %s712 = scalar_lea.vmem %s6, 1
        %v713 = vld [vmem:[%s712] ss:$2 sm:$0x3]
        %v715 = vperm.slane %v713, 0
        %v716 = vperm.slane %v713, 1
        %v719 = vadd.f32 %v706, %v715
        %v720 = vadd.f32 %v707, %v716
        %v721 = vadd.f32 %v708, %v715
        %v722 = vadd.f32 %v709, %v716
        %v723 = vadd.f32 %v710, %v715
        %v724 = vadd.f32 %v711, %v716
        %v725 = vmax.f32 %v719, 0.0
        %v726 = vmax.f32 %v720, 0.0
        %v727 = vmax.f32 %v721, 0.0
        %v728 = vmax.f32 %v722, 0.0
        %v729 = vmax.f32 %v723, 0.0
        %v730 = vmax.f32 %v724, 0.0
        %v731 = vpack.c.bf16 %v727, %v725
        %v732 = vpack.c.bf16 %v728, %v726
        %v733 = vpack.c.bf16 %v729, %v729
        %v734 = vpack.c.bf16 %v730, %v730
        %v735 = vld [vmem:[#allocation5] sm:$0xf]
        %v736 = vld [vmem:[#allocation5 + $0x4] sm:$0xf]
        %v737 = vld [vmem:[#allocation5 + $0x8] sm:$0xf]
        %v738 = vld [vmem:[#allocation5 + $0xc] sm:$0xf]
        %v739 = vld [vmem:[#allocation5 + $0x10] sm:$0xf]
        %v740 = vld [vmem:[#allocation5 + $0x14] sm:$0xf]
        %v741 = vld [vmem:[#allocation5 + $0x18] sm:$0xf]
        %v742 = vld [vmem:[#allocation5 + $0x1c] sm:$0xf]
        %v743 = vld [vmem:[#allocation5 + $0x20] sm:$0xf]
        %v744 = vld [vmem:[#allocation5 + $0x24] sm:$0xf]
        %v745 = vld [vmem:[#allocation5 + $0x28] sm:$0xf]
        %v746 = vld [vmem:[#allocation5 + $0x2c] sm:$0xf]
        %v747 = vld [vmem:[#allocation5 + $0x30] sm:$0xf]
        %v748 = vld [vmem:[#allocation5 + $0x34] sm:$0xf]
        %v749 = vld [vmem:[#allocation5 + $0x38] sm:$0xf]
        %v750 = vld [vmem:[#allocation5 + $0x3c] sm:$0xf]
        %v751 = vld [vmem:[#allocation5 + $0x40] sm:$0xf]
        %v752 = vld [vmem:[#allocation5 + $0x44] sm:$0xf]
        %v753 = vld [vmem:[#allocation5 + $0x48] sm:$0xf]
        %v754 = vld [vmem:[#allocation5 + $0x4c] sm:$0xf]
        %v755 = vld [vmem:[#allocation5 + $0x50] sm:$0xf]
        %v756 = vld [vmem:[#allocation5 + $0x54] sm:$0xf]
        %v757 = vld [vmem:[#allocation5 + $0x58] sm:$0xf]
        %v758 = vld [vmem:[#allocation5 + $0x5c] sm:$0xf]
        %v759 = vld [vmem:[#allocation5 + $0x60] sm:$0xf]
        %v760 = vld [vmem:[#allocation5 + $0x64] sm:$0xf]
        %v761 = vld [vmem:[#allocation5 + $0x68] sm:$0xf]
        %v762 = vld [vmem:[#allocation5 + $0x6c] sm:$0xf]
        %v763 = vld [vmem:[#allocation5 + $0x70] sm:$0xf]
        %v764 = vld [vmem:[#allocation5 + $0x74] sm:$0xf]
        %v765 = vld [vmem:[#allocation5 + $0x78] sm:$0xf]
        %v766 = vld [vmem:[#allocation5 + $0x7c] sm:$0xf]
        %v799 = vunpack.c.l.b16 %v735
        %v800 = vunpack.c.l.b16 %v736
        %v801 = vunpack.c.l.b16 %v737
        %v802 = vunpack.c.l.b16 %v738
        %v803 = vunpack.c.l.b16 %v739
        %v804 = vunpack.c.l.b16 %v740
        %v805 = vunpack.c.l.b16 %v741
        %v806 = vunpack.c.l.b16 %v742
        %v807 = vunpack.c.l.b16 %v743
        %v808 = vunpack.c.l.b16 %v744
        %v809 = vunpack.c.l.b16 %v745
        %v810 = vunpack.c.l.b16 %v746
        %v811 = vunpack.c.l.b16 %v747
        %v812 = vunpack.c.l.b16 %v748
        %v813 = vunpack.c.l.b16 %v749
        %v814 = vunpack.c.l.b16 %v750
        %v815 = vunpack.c.l.b16 %v751
        %v816 = vunpack.c.l.b16 %v752
        %v817 = vunpack.c.l.b16 %v753
        %v818 = vunpack.c.l.b16 %v754
        %v819 = vunpack.c.l.b16 %v755
        %v820 = vunpack.c.l.b16 %v756
        %v821 = vunpack.c.l.b16 %v757
        %v822 = vunpack.c.l.b16 %v758
        %v823 = vunpack.c.l.b16 %v759
        %v824 = vunpack.c.l.b16 %v760
        %v825 = vunpack.c.l.b16 %v761
        %v826 = vunpack.c.l.b16 %v762
        %v827 = vunpack.c.l.b16 %v763
        %v828 = vunpack.c.l.b16 %v764
        %v829 = vunpack.c.l.b16 %v765
        %v830 = vunpack.c.l.b16 %v766
        %v831 = vpack.c.b16 %v800, %v799
        %v832 = vpack.c.b16 %v802, %v801
        %v833 = vpack.c.b16 %v804, %v803
        %v834 = vpack.c.b16 %v806, %v805
        %v835 = vpack.c.b16 %v808, %v807
        %v836 = vpack.c.b16 %v810, %v809
        %v837 = vpack.c.b16 %v812, %v811
        %v838 = vpack.c.b16 %v814, %v813
        %v839 = vpack.c.b16 %v816, %v815
        %v840 = vpack.c.b16 %v818, %v817
        %v841 = vpack.c.b16 %v820, %v819
        %v842 = vpack.c.b16 %v822, %v821
        %v843 = vpack.c.b16 %v824, %v823
        %v844 = vpack.c.b16 %v826, %v825
        %v845 = vpack.c.b16 %v828, %v827
        %v846 = vpack.c.b16 %v830, %v829
        %863 = vmatpush.bf16.msra.mxu0 %v838
        %864 = vmatpush.bf16.msra.mxu0 %v837
        %865 = vmatpush.bf16.msra.mxu0 %v836
        %866 = vmatpush.bf16.msra.mxu0 %v835
        %867 = vmatpush.bf16.msra.mxu0 %v834
        %868 = vmatpush.bf16.msra.mxu0 %v833
        %869 = vmatpush.bf16.msra.mxu0 %v832
        %870 = vmatpush.bf16.msra.mxu0 %v831
        %871 = vmatmul.bf16.gmra.mxu0 %v731
        %v872 = vpop.f32.mrf.mxu0
        %v873 = vadd.f32 0.0, %v872
        %v874 = vpop.f32.mrf.mxu0
        %v875 = vadd.f32 0.0, %v874
        %876 = vmatmul.bf16.gmra.mxu0 %v733
        %v877 = vpop.f32.mrf.mxu0
        %v878 = vadd.f32 0.0, %v877
        %v879 = vpop.f32.mrf.mxu0
        %880 = vdwg.mxu0
        %881 = vmatpush.bf16.msra.mxu0 %v846
        %882 = vmatpush.bf16.msra.mxu0 %v845
        %883 = vmatpush.bf16.msra.mxu0 %v844
        %884 = vmatpush.bf16.msra.mxu0 %v843
        %885 = vmatpush.bf16.msra.mxu0 %v842
        %886 = vmatpush.bf16.msra.mxu0 %v841
        %887 = vmatpush.bf16.msra.mxu0 %v840
        %888 = vmatpush.bf16.msra.mxu0 %v839
        %889 = vmatmul.bf16.gmra.mxu0 %v732
        %v890 = vpop.f32.mrf.mxu0
        %v891 = vadd.f32 %v873, %v890
        %v892 = vpop.f32.mrf.mxu0
        %v893 = vadd.f32 %v875, %v892
        %894 = vmatmul.bf16.gmra.mxu0 %v734
        %v895 = vpop.f32.mrf.mxu0
        %v896 = vadd.f32 %v878, %v895
        %v897 = vpop.f32.mrf.mxu0
        %898 = vdwg.mxu0
        %v899 = vld [vmem:[%s7] sm:$0x1]
        %v900 = vperm.slane %v899, 0
        %v901 = vmul.f32 %v891, %v900
        %v902 = vmul.f32 %v893, %v900
        %v903 = vmul.f32 %v896, %v900
        %v904 = vld [vmem:[%s7 + $0x1] sm:$0x1]
        %v905 = vperm.slane %v904, 0
        %v906 = vadd.f32 %v901, %v905
        %v907 = vadd.f32 %v902, %v905
        %v908 = vadd.f32 %v903, %v905
        %v909 = vmax.f32 %v906, 0.0
        %v910 = vmax.f32 %v907, 0.0
        %v911 = vmax.f32 %v908, 0.0
        %v912 = vld [vmem:[#allocation7] sm:$0xff]
        %v913 = vld [vmem:[#allocation7 + $0x8] sm:$0xf]
        %v914 = vld [vmem:[#allocation7 + $0xc] sm:$0xff]
        %v915 = vld [vmem:[#allocation7 + $0x14] sm:$0xf]
        %v916 = vld [vmem:[#allocation7 + $0x18] sm:$0xff]
        %v917 = vld [vmem:[#allocation7 + $0x20] sm:$0xf]
        %v918 = vld [vmem:[#allocation7 + $0x24] sm:$0xff]
        %v919 = vld [vmem:[#allocation7 + $0x2c] sm:$0xf]
        %v920 = vld [vmem:[#allocation7 + $0x30] sm:$0xff]
        %v921 = vld [vmem:[#allocation7 + $0x38] sm:$0xf]
        %v922 = vld [vmem:[#allocation7 + $0x3c] sm:$0xff]
        %v923 = vld [vmem:[#allocation7 + $0x44] sm:$0xf]
        %v924 = vld [vmem:[#allocation7 + $0x48] sm:$0xff]
        %v925 = vld [vmem:[#allocation7 + $0x50] sm:$0xf]
        %v926 = vld [vmem:[#allocation7 + $0x54] sm:$0xff]
        %v927 = vld [vmem:[#allocation7 + $0x5c] sm:$0xf]
        %v944 = vunpack.c.l.b16 %v912
        %v945 = vunpack.c.h.b16 %v912
        %v946 = vunpack.c.l.b16 %v913
        %v947 = vunpack.c.l.b16 %v914
        %v948 = vunpack.c.h.b16 %v914
        %v949 = vunpack.c.l.b16 %v915
        %v950 = vunpack.c.l.b16 %v916
        %v951 = vunpack.c.h.b16 %v916
        %v952 = vunpack.c.l.b16 %v917
        %v953 = vunpack.c.l.b16 %v918
        %v954 = vunpack.c.h.b16 %v918
        %v955 = vunpack.c.l.b16 %v919
        %v956 = vunpack.c.l.b16 %v920
        %v957 = vunpack.c.h.b16 %v920
        %v958 = vunpack.c.l.b16 %v921
        %v959 = vunpack.c.l.b16 %v922
        %v960 = vunpack.c.h.b16 %v922
        %v961 = vunpack.c.l.b16 %v923
        %v962 = vunpack.c.l.b16 %v924
        %v963 = vunpack.c.h.b16 %v924
        %v964 = vunpack.c.l.b16 %v925
        %v965 = vunpack.c.l.b16 %v926
        %v966 = vunpack.c.h.b16 %v926
        %v967 = vunpack.c.l.b16 %v927
        %v968 = vpack.c.b16 %v947, %v944
        %v969 = vpack.c.b16 %v948, %v945
        %v970 = vpack.c.b16 %v949, %v946
        %v971 = vpack.c.b16 %v953, %v950
        %v972 = vpack.c.b16 %v954, %v951
        %v973 = vpack.c.b16 %v955, %v952
        %v974 = vpack.c.b16 %v959, %v956
        %v975 = vpack.c.b16 %v960, %v957
        %v976 = vpack.c.b16 %v961, %v958
        %v977 = vpack.c.b16 %v965, %v962
        %v978 = vpack.c.b16 %v966, %v963
        %v979 = vpack.c.b16 %v967, %v964
        %992 = vmatpush.bf16.msra.mxu0 0
        %993 = vmatpush.bf16.msra.mxu0 0
        %994 = vmatpush.bf16.msra.mxu0 0
        %995 = vmatpush.bf16.msra.mxu0 0
        %996 = vmatpush.bf16.msra.mxu0 %v977
        %997 = vmatpush.bf16.msra.mxu0 %v974
        %998 = vmatpush.bf16.msra.mxu0 %v971
        %999 = vmatpush.bf16.msra.mxu0 %v968
        %1000 = vmatmul.bf16.gmra.mxu0 %v529
        %v1001 = vpop.f32.mrf.mxu0
        %v1002 = vadd.f32 0.0, %v1001
        %v1003 = vpop.f32.mrf.mxu0
        %v1004 = vadd.f32 0.0, %v1003
        %1005 = vmatmul.bf16.gmra.mxu0 %v532
        %v1006 = vpop.f32.mrf.mxu0
        %v1007 = vadd.f32 0.0, %v1006
        %v1008 = vpop.f32.mrf.mxu0
        %1009 = vdwg.mxu0
        %1010 = vmatpush.bf16.msra.mxu0 0
        %1011 = vmatpush.bf16.msra.mxu0 0
        %1012 = vmatpush.bf16.msra.mxu0 0
        %1013 = vmatpush.bf16.msra.mxu0 0
        %1014 = vmatpush.bf16.msra.mxu0 %v978
        %1015 = vmatpush.bf16.msra.mxu0 %v975
        %1016 = vmatpush.bf16.msra.mxu0 %v972
        %1017 = vmatpush.bf16.msra.mxu0 %v969
        %1018 = vmatmul.bf16.gmra.mxu0 %v529
        %v1019 = vpop.f32.mrf.mxu0
        %v1020 = vadd.f32 0.0, %v1019
        %v1021 = vpop.f32.mrf.mxu0
        %v1022 = vadd.f32 0.0, %v1021
        %1023 = vmatmul.bf16.gmra.mxu0 %v532
        %v1024 = vpop.f32.mrf.mxu0
        %v1025 = vadd.f32 0.0, %v1024
        %v1026 = vpop.f32.mrf.mxu0
        %1027 = vdwg.mxu0
        %1028 = vmatpush.bf16.msra.mxu0 0
        %1029 = vmatpush.bf16.msra.mxu0 0
        %1030 = vmatpush.bf16.msra.mxu0 0
        %1031 = vmatpush.bf16.msra.mxu0 0
        %1032 = vmatpush.bf16.msra.mxu0 %v979
        %1033 = vmatpush.bf16.msra.mxu0 %v976
        %1034 = vmatpush.bf16.msra.mxu0 %v973
        %1035 = vmatpush.bf16.msra.mxu0 %v970
        %1036 = vmatmul.bf16.gmra.mxu0 %v529
        %v1037 = vpop.f32.mrf.mxu0
        %v1038 = vadd.f32 0.0, %v1037
        %v1039 = vpop.f32.mrf.mxu0
        %v1040 = vadd.f32 0.0, %v1039
        %1041 = vmatmul.bf16.gmra.mxu0 %v532
        %v1042 = vpop.f32.mrf.mxu0
        %v1043 = vadd.f32 0.0, %v1042
        %v1044 = vpop.f32.mrf.mxu0
        %1045 = vdwg.mxu0
        %v1049 = vrot.slane %v1020, 1
        %v1050 = vrot.slane %v1022, 1
        %v1051 = vsel %vm648, %v1049, %v1050
        %v1052 = vrot.slane %v1025, 1
        %v1053 = vsel %vm648, %v1050, %v1052
        %v1057 = vadd.f32 %v1002, %v1051
        %v1058 = vadd.f32 %v1004, %v1053
        %v1059 = vadd.f32 %v1007, %v1052
        %v1063 = vrot.slane %v1038, 2
        %v1064 = vrot.slane %v1040, 2
        %v1065 = vsel %vm677, %v1063, %v1064
        %v1066 = vrot.slane %v1043, 2
        %v1067 = vsel %vm677, %v1064, %v1066
        %v1071 = vadd.f32 %v1057, %v1065
        %v1072 = vadd.f32 %v1058, %v1067
        %v1073 = vadd.f32 %v1059, %v1066
        %v1074 = vld [vmem:[%s7 + $0x2] sm:$0x1]
        %v1075 = vperm.slane %v1074, 0
        %v1076 = vmul.f32 %v1071, %v1075
        %v1077 = vmul.f32 %v1072, %v1075
        %v1078 = vmul.f32 %v1073, %v1075
        %v1079 = vld [vmem:[%s7 + $0x3] sm:$0x1]
        %v1080 = vperm.slane %v1079, 0
        %v1081 = vadd.f32 %v1076, %v1080
        %v1082 = vadd.f32 %v1077, %v1080
        %v1083 = vadd.f32 %v1078, %v1080
        %v1084 = vmax.f32 %v1081, 0.0
        %v1085 = vmax.f32 %v1082, 0.0
        %v1086 = vmax.f32 %v1083, 0.0
        %v1087 = vmul.f32 %v909, 0.5
        %v1088 = vmul.f32 %v910, 0.5
        %v1089 = vmul.f32 %v911, 0.5
        %v1090 = vadd.f32 %v1087, %v1084
        %v1091 = vadd.f32 %v1088, %v1085
        %v1092 = vadd.f32 %v1089, %v1086
        %v1093 = vlaneseq
        %v1094 = vshrl.u32 %v1093, 7
        %v1095 = vadd.s32 %v1094, 8
        %v1096 = vadd.s32 %v1094, 16
        %vm1097 = vcmp.ge.s32.totalorder %v1094, 1
        %vm1098 = vcmp.ge.s32.totalorder %v1095, 1
        %vm1099 = vcmp.ge.s32.totalorder %v1096, 1
        %vm1100 = vcmp.le.s32.totalorder %v1094, 16
        %vm1101 = vcmp.le.s32.totalorder %v1095, 16
        %vm1102 = vcmp.le.s32.totalorder %v1096, 16
        %vm1103 = vmand %vm1097, %vm1100
        %vm1104 = vmand %vm1098, %vm1101
        %vm1105 = vmand %vm1099, %vm1102
        %v1106 = vsel %vm1103, 1, 0
        %v1107 = vsel %vm1104, 1, 0
        %v1108 = vsel %vm1105, 1, 0
        %vm1109 = vcmp.eq.s32.totalorder %v1106, 1
        %vm1110 = vcmp.eq.s32.totalorder %v1107, 1
        %vm1111 = vcmp.eq.s32.totalorder %v1108, 1
        %v1112 = vsel %vm1109, %v1090, 0.0
        %v1113 = vsel %vm1110, %v1091, 0.0
        %v1114 = vsel %vm1111, %v1092, 0.0
        %v1115 = vpack.c.bf16 %v1113, %v1112
        %v1116 = vpack.c.bf16 %v1114, %v1114
        %v1117 = vld [vmem:[#allocation8] sm:$0xff]
        %v1118 = vld [vmem:[#allocation8 + $0x8] sm:$0xf]
        %v1119 = vld [vmem:[#allocation8 + $0xc] sm:$0xff]
        %v1120 = vld [vmem:[#allocation8 + $0x14] sm:$0xf]
        %v1121 = vld [vmem:[#allocation8 + $0x18] sm:$0xff]
        %v1122 = vld [vmem:[#allocation8 + $0x20] sm:$0xf]
        %v1123 = vld [vmem:[#allocation8 + $0x24] sm:$0xff]
        %v1124 = vld [vmem:[#allocation8 + $0x2c] sm:$0xf]
        %v1125 = vld [vmem:[#allocation8 + $0x30] sm:$0xff]
        %v1126 = vld [vmem:[#allocation8 + $0x38] sm:$0xf]
        %v1127 = vld [vmem:[#allocation8 + $0x3c] sm:$0xff]
        %v1128 = vld [vmem:[#allocation8 + $0x44] sm:$0xf]
        %v1129 = vld [vmem:[#allocation8 + $0x48] sm:$0xff]
        %v1130 = vld [vmem:[#allocation8 + $0x50] sm:$0xf]
        %v1131 = vld [vmem:[#allocation8 + $0x54] sm:$0xff]
        %v1132 = vld [vmem:[#allocation8 + $0x5c] sm:$0xf]
        %v1133 = vld [vmem:[#allocation8 + $0x60] sm:$0xff]
        %v1134 = vld [vmem:[#allocation8 + $0x68] sm:$0xf]
        %v1135 = vld [vmem:[#allocation8 + $0x6c] sm:$0xff]
        %v1136 = vld [vmem:[#allocation8 + $0x74] sm:$0xf]
        %v1137 = vld [vmem:[#allocation8 + $0x78] sm:$0xff]
        %v1138 = vld [vmem:[#allocation8 + $0x80] sm:$0xf]
        %v1139 = vld [vmem:[#allocation8 + $0x84] sm:$0xff]
        %v1140 = vld [vmem:[#allocation8 + $0x8c] sm:$0xf]
        %v1141 = vld [vmem:[#allocation8 + $0x90] sm:$0xff]
        %v1142 = vld [vmem:[#allocation8 + $0x98] sm:$0xf]
        %v1143 = vld [vmem:[#allocation8 + $0x9c] sm:$0xff]
        %v1144 = vld [vmem:[#allocation8 + $0xa4] sm:$0xf]
        %v1145 = vld [vmem:[#allocation8 + $0xa8] sm:$0xff]
        %v1146 = vld [vmem:[#allocation8 + $0xb0] sm:$0xf]
        %v1147 = vld [vmem:[#allocation8 + $0xb4] sm:$0xff]
        %v1148 = vld [vmem:[#allocation8 + $0xbc] sm:$0xf]
        %v1181 = vunpack.c.l.b16 %v1117
        %v1182 = vunpack.c.h.b16 %v1117
        %v1183 = vunpack.c.l.b16 %v1118
        %v1184 = vunpack.c.l.b16 %v1119
        %v1185 = vunpack.c.h.b16 %v1119
        %v1186 = vunpack.c.l.b16 %v1120
        %v1187 = vunpack.c.l.b16 %v1121
        %v1188 = vunpack.c.h.b16 %v1121
        %v1189 = vunpack.c.l.b16 %v1122
        %v1190 = vunpack.c.l.b16 %v1123
        %v1191 = vunpack.c.h.b16 %v1123
        %v1192 = vunpack.c.l.b16 %v1124
        %v1193 = vunpack.c.l.b16 %v1125
        %v1194 = vunpack.c.h.b16 %v1125
        %v1195 = vunpack.c.l.b16 %v1126
        %v1196 = vunpack.c.l.b16 %v1127
        %v1197 = vunpack.c.h.b16 %v1127
        %v1198 = vunpack.c.l.b16 %v1128
        %v1199 = vunpack.c.l.b16 %v1129
        %v1200 = vunpack.c.h.b16 %v1129
        %v1201 = vunpack.c.l.b16 %v1130
        %v1202 = vunpack.c.l.b16 %v1131
        %v1203 = vunpack.c.h.b16 %v1131
        %v1204 = vunpack.c.l.b16 %v1132
        %v1205 = vunpack.c.l.b16 %v1133
        %v1206 = vunpack.c.h.b16 %v1133
        %v1207 = vunpack.c.l.b16 %v1134
        %v1208 = vunpack.c.l.b16 %v1135
        %v1209 = vunpack.c.h.b16 %v1135
        %v1210 = vunpack.c.l.b16 %v1136
        %v1211 = vunpack.c.l.b16 %v1137
        %v1212 = vunpack.c.h.b16 %v1137
        %v1213 = vunpack.c.l.b16 %v1138
        %v1214 = vunpack.c.l.b16 %v1139
        %v1215 = vunpack.c.h.b16 %v1139
        %v1216 = vunpack.c.l.b16 %v1140
        %v1217 = vunpack.c.l.b16 %v1141
        %v1218 = vunpack.c.h.b16 %v1141
        %v1219 = vunpack.c.l.b16 %v1142
        %v1220 = vunpack.c.l.b16 %v1143
        %v1221 = vunpack.c.h.b16 %v1143
        %v1222 = vunpack.c.l.b16 %v1144
        %v1223 = vunpack.c.l.b16 %v1145
        %v1224 = vunpack.c.h.b16 %v1145
        %v1225 = vunpack.c.l.b16 %v1146
        %v1226 = vunpack.c.l.b16 %v1147
        %v1227 = vunpack.c.h.b16 %v1147
        %v1228 = vunpack.c.l.b16 %v1148
        %v1229 = vpack.c.b16 %v1184, %v1181
        %v1230 = vpack.c.b16 %v1185, %v1182
        %v1231 = vpack.c.b16 %v1186, %v1183
        %v1232 = vpack.c.b16 %v1190, %v1187
        %v1233 = vpack.c.b16 %v1191, %v1188
        %v1234 = vpack.c.b16 %v1192, %v1189
        %v1235 = vpack.c.b16 %v1196, %v1193
        %v1236 = vpack.c.b16 %v1197, %v1194
        %v1237 = vpack.c.b16 %v1198, %v1195
        %v1238 = vpack.c.b16 %v1202, %v1199
        %v1239 = vpack.c.b16 %v1203, %v1200
        %v1240 = vpack.c.b16 %v1204, %v1201
        %v1241 = vpack.c.b16 %v1208, %v1205
        %v1242 = vpack.c.b16 %v1209, %v1206
        %v1243 = vpack.c.b16 %v1210, %v1207
        %v1244 = vpack.c.b16 %v1214, %v1211
        %v1245 = vpack.c.b16 %v1215, %v1212
        %v1246 = vpack.c.b16 %v1216, %v1213
        %v1247 = vpack.c.b16 %v1220, %v1217
        %v1248 = vpack.c.b16 %v1221, %v1218
        %v1249 = vpack.c.b16 %v1222, %v1219
        %v1250 = vpack.c.b16 %v1226, %v1223
        %v1251 = vpack.c.b16 %v1227, %v1224
        %v1252 = vpack.c.b16 %v1228, %v1225
        %1277 = vmatpush.bf16.msra.mxu0 %v1250
        %1278 = vmatpush.bf16.msra.mxu0 %v1247
        %1279 = vmatpush.bf16.msra.mxu0 %v1244
        %1280 = vmatpush.bf16.msra.mxu0 %v1241
        %1281 = vmatpush.bf16.msra.mxu0 %v1238
        %1282 = vmatpush.bf16.msra.mxu0 %v1235
        %1283 = vmatpush.bf16.msra.mxu0 %v1232
        %1284 = vmatpush.bf16.msra.mxu0 %v1229
        %1285 = vmatmul.bf16.gmra.mxu0 %v1115
        %v1286 = vpop.f32.mrf.mxu0
        %v1287 = vadd.f32 0.0, %v1286
        %v1288 = vpop.f32.mrf.mxu0
        %v1289 = vadd.f32 0.0, %v1288
        %1290 = vmatmul.bf16.gmra.mxu0 %v1116
        %v1291 = vpop.f32.mrf.mxu0
        %v1292 = vpop.f32.mrf.mxu0
        %1293 = vdwg.mxu0
        %1294 = vmatpush.bf16.msra.mxu0 %v1251
        %1295 = vmatpush.bf16.msra.mxu0 %v1248
        %1296 = vmatpush.bf16.msra.mxu0 %v1245
        %1297 = vmatpush.bf16.msra.mxu0 %v1242
        %1298 = vmatpush.bf16.msra.mxu0 %v1239
        %1299 = vmatpush.bf16.msra.mxu0 %v1236
        %1300 = vmatpush.bf16.msra.mxu0 %v1233
        %1301 = vmatpush.bf16.msra.mxu0 %v1230
        %1302 = vmatmul.bf16.gmra.mxu0 %v1115
        %v1303 = vpop.f32.mrf.mxu0
        %v1304 = vadd.f32 0.0, %v1303
        %v1305 = vpop.f32.mrf.mxu0
        %v1306 = vadd.f32 0.0, %v1305
        %1307 = vmatmul.bf16.gmra.mxu0 %v1116
        %v1308 = vpop.f32.mrf.mxu0
        %v1309 = vadd.f32 0.0, %v1308
        %v1310 = vpop.f32.mrf.mxu0
        %1311 = vdwg.mxu0
        %1312 = vmatpush.bf16.msra.mxu0 %v1252
        %1313 = vmatpush.bf16.msra.mxu0 %v1249
        %1314 = vmatpush.bf16.msra.mxu0 %v1246
        %1315 = vmatpush.bf16.msra.mxu0 %v1243
        %1316 = vmatpush.bf16.msra.mxu0 %v1240
        %1317 = vmatpush.bf16.msra.mxu0 %v1237
        %1318 = vmatpush.bf16.msra.mxu0 %v1234
        %1319 = vmatpush.bf16.msra.mxu0 %v1231
        %1320 = vmatmul.bf16.gmra.mxu0 %v1115
        %v1321 = vpop.f32.mrf.mxu0
        %v1322 = vadd.f32 0.0, %v1321
        %v1323 = vpop.f32.mrf.mxu0
        %v1324 = vadd.f32 0.0, %v1323
        %1325 = vmatmul.bf16.gmra.mxu0 %v1116
        %v1326 = vpop.f32.mrf.mxu0
        %v1327 = vadd.f32 0.0, %v1326
        %v1328 = vpop.f32.mrf.mxu0
        %1329 = vdwg.mxu0
        %v1333 = vrot.slane %v1304, 1
        %v1334 = vrot.slane %v1306, 1
        %v1335 = vsel %vm648, %v1333, %v1334
        %v1336 = vrot.slane %v1309, 1
        %v1337 = vsel %vm648, %v1334, %v1336
        %v1340 = vadd.f32 %v1287, %v1335
        %v1341 = vadd.f32 %v1289, %v1337
        %v1345 = vrot.slane %v1322, 2
        %v1346 = vrot.slane %v1324, 2
        %v1347 = vsel %vm677, %v1345, %v1346
        %v1348 = vrot.slane %v1327, 2
        %v1349 = vsel %vm677, %v1346, %v1348
        %v1352 = vadd.f32 %v1340, %v1347
        %v1353 = vadd.f32 %v1341, %v1349
        %v1354 = vld [vmem:[%s7 + $0x4] sm:$0x1]
        %v1355 = vperm.slane %v1354, 0
        %v1356 = vmul.f32 %v1352, %v1355
        %v1357 = vmul.f32 %v1353, %v1355
        %v1358 = vld [vmem:[%s7 + $0x5] sm:$0x1]
        %v1359 = vperm.slane %v1358, 0
        %v1360 = vadd.f32 %v1356, %v1359
        %v1361 = vadd.f32 %v1357, %v1359
        %v1362 = vld [vmem:[%s5] sm:$0xf]
        %v1363 = vld [vmem:[%s5 + $0x4] sm:$0xf]
        %v1364 = vld [vmem:[%s5 + $0x8] sm:$0xf]
        %v1365 = vld [vmem:[%s5 + $0xc] sm:$0xf]
        %v1366 = vld [vmem:[%s5 + $0x10] sm:$0xf]
        %v1367 = vld [vmem:[%s5 + $0x14] sm:$0xf]
        %v1368 = vld [vmem:[%s5 + $0x18] sm:$0xf]
        %v1369 = vld [vmem:[%s5 + $0x1c] sm:$0xf]
        %vm1370 = vcmask 1046528
        %v1371 = vrot.slane %v405, 1
        %v1372 = vrot.slane %v406, 1
        %v1373 = vsel %vm1370, %v1371, %v1372
        %v1382 = vunpack.c.l.b16 %v1362
        %v1383 = vunpack.c.l.b16 %v1363
        %v1384 = vunpack.c.l.b16 %v1364
        %v1385 = vunpack.c.l.b16 %v1365
        %v1386 = vunpack.c.l.b16 %v1366
        %v1387 = vunpack.c.l.b16 %v1367
        %v1388 = vunpack.c.l.b16 %v1368
        %v1389 = vunpack.c.l.b16 %v1369
        %v1390 = vpack.c.b16 %v1383, %v1382
        %v1391 = vpack.c.b16 %v1385, %v1384
        %v1392 = vpack.c.b16 %v1387, %v1386
        %v1393 = vpack.c.b16 %v1389, %v1388
        %v1399 = vsel %vm527, %v1373, 0
        %1401 = vmatpush.bf16.msra.mxu0 0
        %1402 = vmatpush.bf16.msra.mxu0 0
        %1403 = vmatpush.bf16.msra.mxu0 0
        %1404 = vmatpush.bf16.msra.mxu0 0
        %1405 = vmatpush.bf16.msra.mxu0 %v1393
        %1406 = vmatpush.bf16.msra.mxu0 %v1392
        %1407 = vmatpush.bf16.msra.mxu0 %v1391
        %1408 = vmatpush.bf16.msra.mxu0 %v1390
        %1409 = vmatmul.bf16.gmra.mxu0 %v1399
        %v1410 = vpop.f32.mrf.mxu0
        %v1411 = vadd.f32 0.0, %v1410
        %v1412 = vpop.f32.mrf.mxu0
        %v1413 = vadd.f32 0.0, %v1412
        %1414 = vdwg.mxu0
        %v1415 = vld [vmem:[%s7 + $0x6] sm:$0x1]
        %v1416 = vperm.slane %v1415, 0
        %v1417 = vmul.f32 %v1411, %v1416
        %v1418 = vmul.f32 %v1413, %v1416
        %v1419 = vld [vmem:[%s7 + $0x7] sm:$0x1]
        %v1420 = vperm.slane %v1419, 0
        %v1421 = vadd.f32 %v1417, %v1420
        %v1422 = vadd.f32 %v1418, %v1420
        %v1423 = vadd.f32 %v1360, %v1421
        %v1424 = vadd.f32 %v1361, %v1422
        %v1425 = vpack.c.bf16 %v1423, %v1423
        %v1426 = vpack.c.bf16 %v1424, %v1424
        %1427 = vst [vmem:[%s365] sm:$0xf] %v1425
        %1428 = vst [vmem:[%s365 + $0x4] sm:$0xf] %v1426
        %s1429 = sand.u32 %s206, 1
        %s1430 = scalar_lea.sflag [#allocation4], %s1429
        %s1431 = sand.u32 %s206, 1
        %s1432 = smul.addr %s1431, 8
        %s1433 = scalar_lea.vmem [#allocation10], %s1432
        // Predicated region
        $region69: #{tpu_custom_call.1} parent=51 // pred_check
          %p1434 = pneg %p216
        $region70: #{tpu_custom_call.1} parent=51 // pred_check_branch
          %1436 = sbr.rel (%p1434) target = $region72
        $region71: #{tpu_custom_call.1} parent=51 // pred_region
          %1438 = vsyncadd %s1430, 0
          %s1439 = smul.addr %s25, 2
          %s1440 = smul.addr %s1439, 4
          %s1441 = scalar_lea.hbm %s8, %s1440
          %s1442 = sshll.u32 %s1433, 4
          %s1443 = int_to_ptr.vmem [resolvable:$true] %s1442
          %s1444 = sshll.u32 %s1441, 4
          %s1445 = int_to_ptr.hbm [resolvable:$true] %s1444
          %1450 = dma.vmem_to_hbm [thread:$0]  %s1443, 128, %s1445, %s1430, 64, 64, 4
        $region72: #{tpu_custom_call.1} parent=51 // pred_fallthru
          _
      $region52: #{tpu_custom_call.1} parent=5 // pred_fallthru
        _
      %p1451 = scmp.le.s32.totalorder 2, %s20
      // Predicated region
      $region73: #{tpu_custom_call.1} parent=5 // pred_check
        %p1452 = pneg %p1451
      $region74: #{tpu_custom_call.1} parent=5 // pred_check_branch
        %1454 = sbr.rel (%p1452) target = $region76
      $region75: #{tpu_custom_call.1} parent=5 // pred_region
        %s1455 = ssub.s32 %s20, 2
        // Predicated region
        $region77: #{tpu_custom_call.1} parent=75 // pred_check
          %p1456 = pneg %p222
        $region78: #{tpu_custom_call.1} parent=75 // pred_check_branch
          %1458 = sbr.rel (%p1456) target = $region80
        $region79: #{tpu_custom_call.1} parent=75 // pred_region
          %s1459 = sand.u32 %s207, 1
          %s1460 = scalar_lea.sflag [#allocation4], %s1459
          %s1461 = sand.u32 %s207, 1
          %s1462 = smul.addr %s1461, 8
          %s1463 = scalar_lea.vmem [#allocation10], %s1462
          %1465 = dma.done %s1460, 128
        $region80: #{tpu_custom_call.1} parent=75 // pred_fallthru
          _
      $region76: #{tpu_custom_call.1} parent=5 // pred_fallthru
        _
    $region6: #{tpu_custom_call.1} parent=1 // loop_footer
      %s24 = sadd.s32 1, %s20
    $region7: #{tpu_custom_call.1} parent=1 // loop_footer_branch
      %19 = sbr.rel target = $region3
    $region8: #{tpu_custom_call.1} parent=1 // loop_exit
      _
    %1466 = vsyncpa [#allocation3], 1
    %s1467 = scalar_lea.sflag [#allocation3], 1
    %1468 = vsyncpa %s1467, 1
    %1469 = vsyncpa [#allocation6], 1
    %1470 = vsyncpa [#allocation9], 1
    %1471 = vsyncpa [#allocation4], 1
    %s1472 = scalar_lea.sflag [#allocation4], 1
    %1473 = vsyncpa %s1472, 1

</llo_original>
